<compile_context>
chip_gen: v7x
topology: tpu7x:2x2x1
jax: 0.10.0
libtpu: 0.0.40
codegen_flags: <defaults>
</compile_context>

<pallas_src>
import functools

import jax
import jax.numpy as jnp
from jax.experimental import pallas as pl
from jax.experimental.pallas import tpu as pltpu

IMG_SHAPE = 28 * 28   # 784
LN_EPS = 1e-5         # torch.nn.LayerNorm default


def _layer_norm(x, gamma, beta):
    # x: (TB, D) f32, gamma/beta: (1, D) f32 — biased variance, like torch.
    mu = jnp.mean(x, axis=-1, keepdims=True)
    xc = x - mu
    var = jnp.mean(xc * xc, axis=-1, keepdims=True)
    xn = xc * jax.lax.rsqrt(var + LN_EPS)
    return xn * gamma + beta


def classifier_kernel(img_ref, g1_ref, b1_ref, w1t_ref,
                      g2_ref, b2_ref, w2_ref, out_ref):
    x = img_ref[...].astype(jnp.float32)                       # (TB, D)

    # --- feature_extractor: LN -> Linear(784,784) -> Sigmoid ---
    xn = _layer_norm(x, g1_ref[...], b1_ref[...])              # (TB, D) f32
    # bf16 x bf16 MXU matmul, f32 accumulation.
    h = jnp.dot(xn.astype(jnp.bfloat16), w1t_ref[...],
                preferred_element_type=jnp.float32)            # (TB, D) f32
    h = jax.nn.sigmoid(h)

    # --- pred_model: LN -> Linear(784,1) -> Sigmoid ---
    hn = _layer_norm(h, g2_ref[...], b2_ref[...])              # (TB, D) f32
    # N=1 "matmul" as VPU multiply + lane reduce (w2 kept as (1, D) f32).
    p = jnp.sum(hn * w2_ref[...], axis=-1, keepdims=True)      # (TB, 1)
    out_ref[...] = jax.nn.sigmoid(p).astype(out_ref.dtype)


def prepare_params(g1, b1, w1, g2, b2, w2):
    """One-time parameter massaging (hoisted out of the per-call path).

    w1: (784, 784) torch layout (out, in) -> transposed to (in, out) bf16.
    w2: (1, 784)   torch layout           -> kept as (1, 784) f32.
    """
    D = g1.shape[0]
    return (g1.reshape(1, D).astype(jnp.float32),
            b1.reshape(1, D).astype(jnp.float32),
            jnp.transpose(w1).astype(jnp.bfloat16),     # (D_in, D_out) bf16
            g2.reshape(1, D).astype(jnp.float32),
            b2.reshape(1, D).astype(jnp.float32),
            w2.reshape(1, D).astype(jnp.float32))


@functools.partial(jax.jit, static_argnames=("tb",))
def classifier_forward(img, g1, b1, w1t, g2, b2, w2, *, tb=256):
    """img: (B, 784) f32; params as produced by `prepare_params`."""
    B, D = img.shape
    assert D == IMG_SHAPE
    tb = min(tb, B)                       # batch tile (sublane-aligned for B>=8)
    grid = (pl.cdiv(B, tb),)

    img_spec = pl.BlockSpec((tb, D), lambda i: (i, 0))
    out_spec = pl.BlockSpec((tb, 1), lambda i: (i, 0))
    # Weights / LN params stay VMEM-resident across the batch grid.
    g_spec = pl.BlockSpec((1, D), lambda i: (0, 0))
    w1_spec = pl.BlockSpec((D, D), lambda i: (0, 0))
    w2_spec = pl.BlockSpec((1, D), lambda i: (0, 0))

    return pl.pallas_call(
        classifier_kernel,
        out_shape=jax.ShapeDtypeStruct((B, 1), jnp.float32),
        grid=grid,
        in_specs=[img_spec, g_spec, g_spec, w1_spec, g_spec, g_spec, w2_spec],
        out_specs=out_spec,
        compiler_params=pltpu.CompilerParams(
            dimension_semantics=("parallel",),
            vmem_limit_bytes=32 * 1024 * 1024,
        ),
    )(img, g1, b1, w1t, g2, b2, w2)


def init_params(key):
    """Deterministic parameter init mirroring the module's shapes (torch layout)."""
    k1, k2 = jax.random.split(key)
    D = IMG_SHAPE
    bound = 1.0 / jnp.sqrt(jnp.float32(D))   # torch kaiming-uniform bound for Linear
    g1 = jnp.ones((D,), jnp.float32)
    b1 = jnp.zeros((D,), jnp.float32)
    g2 = jnp.ones((D,), jnp.float32)
    b2 = jnp.zeros((D,), jnp.float32)
    w1 = jax.random.uniform(k1, (D, D), jnp.float32, -bound, bound)   # (out, in)
    w2 = jax.random.uniform(k2, (1, D), jnp.float32, -bound, bound)   # (out, in)
    return g1, b1, w1, g2, b2, w2


def _reference_forward(img, g1, b1, w1t, g2, b2, w2):
    """Pure-JAX reference using the same bf16 weights (for plumbing check)."""
    xn = _layer_norm(img.astype(jnp.float32), g1, b1)
    h = jax.nn.sigmoid(
        jnp.dot(xn.astype(jnp.bfloat16), w1t, preferred_element_type=jnp.float32))
    hn = _layer_norm(h, g2, b2)
    p = jnp.sum(hn * w2, axis=-1, keepdims=True)
    return jax.nn.sigmoid(p)


if __name__ == "__main__":
    key = jax.random.PRNGKey(0)
    k_img, k_param = jax.random.split(key)

    B = 8
    img = jax.random.normal(k_img, (B, IMG_SHAPE), jnp.float32)
    raw = init_params(k_param)
    params = prepare_params(*raw)

    preds = classifier_forward(img, *params)
    jax.block_until_ready(preds)

    assert preds.shape == (B, 1) and preds.dtype == jnp.float32
    ref = _reference_forward(img, *params)
    assert jnp.all(jnp.isfinite(preds))
    assert jnp.max(jnp.abs(preds - ref)) < 1e-3
    print("KERNEL_OK")
</pallas_src>

<mosaic_0001>
module attributes {stable_mosaic.version = 11 : i64} {
  func.func @classifier_kernel(%arg0: i32, %arg1: memref<8x784xf32, #tpu.memory_space<vmem>>, %arg2: memref<1x784xf32, #tpu.memory_space<vmem>>, %arg3: memref<1x784xf32, #tpu.memory_space<vmem>>, %arg4: memref<784x784xbf16, #tpu.memory_space<vmem>>, %arg5: memref<1x784xf32, #tpu.memory_space<vmem>>, %arg6: memref<1x784xf32, #tpu.memory_space<vmem>>, %arg7: memref<1x784xf32, #tpu.memory_space<vmem>>, %arg8: memref<8x1xf32, #tpu.memory_space<vmem>>) attributes {dimension_semantics = [#tpu.dimension_semantics<parallel>], iteration_bounds = array<i64: 1>, scalar_prefetch = 0 : i64, scratch_operands = 0 : i64, tpu.core_type = #tpu.core_type<tc>, window_params = [{transform_indices = @transform_0, window_bounds = array<i64: 8, 784>}, {pipeline_mode = #tpu.pipeline_mode<synchronous>, transform_indices = @transform_1, window_bounds = array<i64: 1, 784>}, {pipeline_mode = #tpu.pipeline_mode<synchronous>, transform_indices = @transform_2, window_bounds = array<i64: 1, 784>}, {pipeline_mode = #tpu.pipeline_mode<synchronous>, transform_indices = @transform_3, window_bounds = array<i64: 784, 784>}, {pipeline_mode = #tpu.pipeline_mode<synchronous>, transform_indices = @transform_4, window_bounds = array<i64: 1, 784>}, {pipeline_mode = #tpu.pipeline_mode<synchronous>, transform_indices = @transform_5, window_bounds = array<i64: 1, 784>}, {pipeline_mode = #tpu.pipeline_mode<synchronous>, transform_indices = @transform_6, window_bounds = array<i64: 1, 784>}, {transform_indices = @transform_7, window_bounds = array<i64: 8, 1>}]} {
    %c0 = arith.constant 0 : index
    %c0_0 = arith.constant 0 : index
    %0 = vector.load %arg1[%c0, %c0_0] : memref<8x784xf32, #tpu.memory_space<vmem>>, vector<8x784xf32>
    %c0_1 = arith.constant 0 : index
    %c0_2 = arith.constant 0 : index
    %1 = vector.load %arg2[%c0_1, %c0_2] : memref<1x784xf32, #tpu.memory_space<vmem>>, vector<1x784xf32>
    %c0_3 = arith.constant 0 : index
    %c0_4 = arith.constant 0 : index
    %2 = vector.load %arg3[%c0_3, %c0_4] : memref<1x784xf32, #tpu.memory_space<vmem>>, vector<1x784xf32>
    %cst = arith.constant dense<0.000000e+00> : vector<8xf32>
    %3 = vector.multi_reduction <add>, %0, %cst [1] : vector<8x784xf32> to vector<8xf32>
    %4 = vector.shape_cast %3 : vector<8xf32> to vector<8x1xf32>
    %cst_5 = arith.constant 7.840000e+02 : f32
    %5 = vector.broadcast %cst_5 : f32 to vector<8x1xf32>
    %6 = arith.divf %4, %5 : vector<8x1xf32>
    %7 = vector.broadcast %6 : vector<8x1xf32> to vector<8x784xf32>
    %8 = arith.subf %0, %7 : vector<8x784xf32>
    %9 = arith.mulf %8, %8 : vector<8x784xf32>
    %cst_6 = arith.constant dense<0.000000e+00> : vector<8xf32>
    %10 = vector.multi_reduction <add>, %9, %cst_6 [1] : vector<8x784xf32> to vector<8xf32>
    %11 = vector.shape_cast %10 : vector<8xf32> to vector<8x1xf32>
    %cst_7 = arith.constant 7.840000e+02 : f32
    %12 = vector.broadcast %cst_7 : f32 to vector<8x1xf32>
    %13 = arith.divf %11, %12 : vector<8x1xf32>
    %cst_8 = arith.constant 9.99999974E-6 : f32
    %14 = vector.broadcast %cst_8 : f32 to vector<8x1xf32>
    %15 = arith.addf %13, %14 : vector<8x1xf32>
    %16 = math.rsqrt %15 : vector<8x1xf32>
    %17 = vector.broadcast %16 : vector<8x1xf32> to vector<8x784xf32>
    %18 = arith.mulf %8, %17 : vector<8x784xf32>
    %19 = vector.broadcast %1 : vector<1x784xf32> to vector<8x784xf32>
    %20 = arith.mulf %18, %19 : vector<8x784xf32>
    %21 = vector.broadcast %2 : vector<1x784xf32> to vector<8x784xf32>
    %22 = arith.addf %20, %21 : vector<8x784xf32>
    %23 = arith.truncf %22 : vector<8x784xf32> to vector<8x784xbf16>
    %c0_9 = arith.constant 0 : index
    %c0_10 = arith.constant 0 : index
    %24 = vector.load %arg4[%c0_9, %c0_10] : memref<784x784xbf16, #tpu.memory_space<vmem>>, vector<784x784xbf16>
    %cst_11 = arith.constant dense<0.000000e+00> : vector<8x784xf32>
    %25 = tpu.matmul %23, %24, %cst_11 {dimension_numbers = #tpu.dot_dimension_numbers<[1], [0], [0], [1], [0, 0, 1, 1], [], []>} : vector<8x784xbf16>, vector<784x784xbf16>, vector<8x784xf32> -> vector<8x784xf32>
    %26 = arith.negf %25 : vector<8x784xf32>
    %27 = math.exp %26 : vector<8x784xf32>
    %cst_12 = arith.constant 1.000000e+00 : f32
    %28 = vector.broadcast %cst_12 : f32 to vector<8x784xf32>
    %29 = arith.addf %28, %27 : vector<8x784xf32>
    %30 = arith.divf %28, %29 : vector<8x784xf32>
    %c0_13 = arith.constant 0 : index
    %c0_14 = arith.constant 0 : index
    %31 = vector.load %arg5[%c0_13, %c0_14] : memref<1x784xf32, #tpu.memory_space<vmem>>, vector<1x784xf32>
    %c0_15 = arith.constant 0 : index
    %c0_16 = arith.constant 0 : index
    %32 = vector.load %arg6[%c0_15, %c0_16] : memref<1x784xf32, #tpu.memory_space<vmem>>, vector<1x784xf32>
    %cst_17 = arith.constant dense<0.000000e+00> : vector<8xf32>
    %33 = vector.multi_reduction <add>, %30, %cst_17 [1] : vector<8x784xf32> to vector<8xf32>
    %34 = vector.shape_cast %33 : vector<8xf32> to vector<8x1xf32>
    %cst_18 = arith.constant 7.840000e+02 : f32
    %35 = vector.broadcast %cst_18 : f32 to vector<8x1xf32>
    %36 = arith.divf %34, %35 : vector<8x1xf32>
    %37 = vector.broadcast %36 : vector<8x1xf32> to vector<8x784xf32>
    %38 = arith.subf %30, %37 : vector<8x784xf32>
    %39 = arith.mulf %38, %38 : vector<8x784xf32>
    %cst_19 = arith.constant dense<0.000000e+00> : vector<8xf32>
    %40 = vector.multi_reduction <add>, %39, %cst_19 [1] : vector<8x784xf32> to vector<8xf32>
    %41 = vector.shape_cast %40 : vector<8xf32> to vector<8x1xf32>
    %cst_20 = arith.constant 7.840000e+02 : f32
    %42 = vector.broadcast %cst_20 : f32 to vector<8x1xf32>
    %43 = arith.divf %41, %42 : vector<8x1xf32>
    %cst_21 = arith.constant 9.99999974E-6 : f32
    %44 = vector.broadcast %cst_21 : f32 to vector<8x1xf32>
    %45 = arith.addf %43, %44 : vector<8x1xf32>
    %46 = math.rsqrt %45 : vector<8x1xf32>
    %47 = vector.broadcast %46 : vector<8x1xf32> to vector<8x784xf32>
    %48 = arith.mulf %38, %47 : vector<8x784xf32>
    %49 = vector.broadcast %31 : vector<1x784xf32> to vector<8x784xf32>
    %50 = arith.mulf %48, %49 : vector<8x784xf32>
    %51 = vector.broadcast %32 : vector<1x784xf32> to vector<8x784xf32>
    %52 = arith.addf %50, %51 : vector<8x784xf32>
    %c0_22 = arith.constant 0 : index
    %c0_23 = arith.constant 0 : index
    %53 = vector.load %arg7[%c0_22, %c0_23] : memref<1x784xf32, #tpu.memory_space<vmem>>, vector<1x784xf32>
    %54 = vector.broadcast %53 : vector<1x784xf32> to vector<8x784xf32>
    %55 = arith.mulf %52, %54 : vector<8x784xf32>
    %cst_24 = arith.constant dense<0.000000e+00> : vector<8xf32>
    %56 = vector.multi_reduction <add>, %55, %cst_24 [1] : vector<8x784xf32> to vector<8xf32>
    %57 = vector.shape_cast %56 : vector<8xf32> to vector<8x1xf32>
    %58 = arith.negf %57 : vector<8x1xf32>
    %59 = math.exp %58 : vector<8x1xf32>
    %cst_25 = arith.constant 1.000000e+00 : f32
    %60 = vector.broadcast %cst_25 : f32 to vector<8x1xf32>
    %61 = arith.addf %60, %59 : vector<8x1xf32>
    %62 = arith.divf %60, %61 : vector<8x1xf32>
    %c0_26 = arith.constant 0 : index
    %c0_27 = arith.constant 0 : index
    %63 = vector.load %arg8[%c0_26, %c0_27] : memref<8x1xf32, #tpu.memory_space<vmem>>, vector<8x1xf32>
    tpu.vector_store %arg8[%c0_26, %c0_27], %62 {strides = array<i32>} : memref<8x1xf32, #tpu.memory_space<vmem>>, vector<8x1xf32>,
    return
  }
  func.func @transform_0(%arg0: i32) -> (i32, i32) {
    %c0_i32 = arith.constant 0 : i32
    %c0_i32_0 = arith.constant 0 : i32
    return %arg0, %c0_i32 : i32, i32
  }
  func.func @transform_1(%arg0: i32) -> (i32, i32) {
    %c0_i32 = arith.constant 0 : i32
    %c0_i32_0 = arith.constant 0 : i32
    %c0_i32_1 = arith.constant 0 : i32
    return %c0_i32, %c0_i32_0 : i32, i32
  }
  func.func @transform_2(%arg0: i32) -> (i32, i32) {
    %c0_i32 = arith.constant 0 : i32
    %c0_i32_0 = arith.constant 0 : i32
    %c0_i32_1 = arith.constant 0 : i32
    return %c0_i32, %c0_i32_0 : i32, i32
  }
  func.func @transform_3(%arg0: i32) -> (i32, i32) {
    %c0_i32 = arith.constant 0 : i32
    %c0_i32_0 = arith.constant 0 : i32
    %c0_i32_1 = arith.constant 0 : i32
    return %c0_i32, %c0_i32_0 : i32, i32
  }
  func.func @transform_4(%arg0: i32) -> (i32, i32) {
    %c0_i32 = arith.constant 0 : i32
    %c0_i32_0 = arith.constant 0 : i32
    %c0_i32_1 = arith.constant 0 : i32
    return %c0_i32, %c0_i32_0 : i32, i32
  }
  func.func @transform_5(%arg0: i32) -> (i32, i32) {
    %c0_i32 = arith.constant 0 : i32
    %c0_i32_0 = arith.constant 0 : i32
    %c0_i32_1 = arith.constant 0 : i32
    return %c0_i32, %c0_i32_0 : i32, i32
  }
  func.func @transform_6(%arg0: i32) -> (i32, i32) {
    %c0_i32 = arith.constant 0 : i32
    %c0_i32_0 = arith.constant 0 : i32
    %c0_i32_1 = arith.constant 0 : i32
    return %c0_i32, %c0_i32_0 : i32, i32
  }
  func.func @transform_7(%arg0: i32) -> (i32, i32) {
    %c0_i32 = arith.constant 0 : i32
    %c0_i32_0 = arith.constant 0 : i32
    return %arg0, %c0_i32 : i32, i32
  }
}

</mosaic_0001>

<llo_original>
// kernel: classifier_forward.1
$region0: #{classifier_forward.1}
  #allocation0 [shape = 'u32[]', space=smem, size = 0x4, offset = 0x4, fixed_abs, tag = 'smem constant byte address 0x4 - core index']
  #allocation1 [shape = 'u32[144,128]{1,0:T(1,128)}', space=vmem, size = 0x12000, scoped, tag = 'internal scratch']
  %s0 = inlined_call_operand.hbm [shape: f32[8,784], index: 0, kind: input, shape index: {}]
  %s1 = inlined_call_operand.hbm [shape: f32[1,784], index: 1, kind: input, shape index: {}]
  %s2 = inlined_call_operand.hbm [shape: f32[1,784], index: 2, kind: input, shape index: {}]
  %s3 = inlined_call_operand.hbm [shape: bf16[784,784], index: 3, kind: input, shape index: {}]
  %s4 = inlined_call_operand.hbm [shape: f32[1,784], index: 4, kind: input, shape index: {}]
  %s5 = inlined_call_operand.hbm [shape: f32[1,784], index: 5, kind: input, shape index: {}]
  %s6 = inlined_call_operand.hbm [shape: f32[1,784], index: 6, kind: input, shape index: {}]
  %s7 = inlined_call_operand.vmem [shape: f32[8,1], index: 7, kind: output, shape index: {}]
  %s8 = sld [smem:[#allocation0]]
  $region66: #{classifier_forward.1} parent=0
    _
  %s10 = ssub.s32 1, %s8
  %s11 = scalar_select 0, %s10, %s8
  $region1: #{classifier_forward.1} parent=0
    #allocation2 [shape = 'u8[28672]{0}', space=vmem, size = 0x7000, scoped, tag = 'input window, operand 0, single buffered']
    #allocation3 [shape = 's32[1]{0}', space=sflag, size = 0x4, scoped, tag = 'scoped memory for classifier_forward.1']
    #allocation4 [shape = 'u8[3584]{0}', space=vmem, size = 0x1000, scoped, tag = 'input window, operand 1, single buffered']
    #allocation5 [shape = 's32[1]{0}', space=sflag, size = 0x4, scoped, tag = 'scoped memory for classifier_forward.1']
    #allocation6 [shape = 'u8[3584]{0}', space=vmem, size = 0x1000, scoped, tag = 'input window, operand 2, single buffered']
    #allocation7 [shape = 'u8[1404928]{0}', space=vmem, size = 0x157000, scoped, tag = 'input window, operand 3, single buffered']
    #allocation8 [shape = 's32[1]{0}', space=sflag, size = 0x4, scoped, tag = 'scoped memory for classifier_forward.1']
    #allocation9 [shape = 'u8[3584]{0}', space=vmem, size = 0x1000, scoped, tag = 'input window, operand 4, single buffered']
    #allocation10 [shape = 'u8[3584]{0}', space=vmem, size = 0x1000, scoped, tag = 'input window, operand 5, single buffered']
    #allocation11 [shape = 's32[1]{0}', space=sflag, size = 0x4, scoped, tag = 'scoped memory for classifier_forward.1']
    #allocation12 [shape = 'u8[3584]{0}', space=vmem, size = 0x1000, scoped, tag = 'input window, operand 6, single buffered']
    %12 = vsyncpa [#allocation3], 0
    %13 = vsyncpa [#allocation5], 0
    %14 = vsyncpa [#allocation8], 0
    %15 = vsyncpa [#allocation11], 0
    // Predicated region
    $region2: #{classifier_forward.1} parent=1 // pred_check
      _
    $region3: #{classifier_forward.1} parent=1 // pred_check_branch
      %17 = sbr.rel (0) target = $region5
    $region4: #{classifier_forward.1} parent=1 // pred_region
      %s19 = ssub.s32 896, 896
      %20 = vsyncadd [#allocation3], %s19
      %s22 = sshll.u32 [#allocation2], 4
      %s23 = int_to_ptr.vmem [resolvable:$true] %s22
      %25 = dma.hbm_to_vmem [thread:$0]  %s0, 896, %s23, [#allocation3]
    $region5: #{classifier_forward.1} parent=1 // pred_fallthru
      _
    // Predicated region
    $region6: #{classifier_forward.1} parent=1 // pred_check
      _
    $region7: #{classifier_forward.1} parent=1 // pred_check_branch
      %27 = sbr.rel (0) target = $region9
    $region8: #{classifier_forward.1} parent=1 // pred_region
      %s29 = ssub.s32 112, 112
      %30 = vsyncadd [#allocation5], %s29
      %s32 = sshll.u32 [#allocation4], 4
      %s33 = int_to_ptr.vmem [resolvable:$true] %s32
      %35 = dma.hbm_to_vmem [thread:$0]  %s1, 112, %s33, [#allocation5]
    $region9: #{classifier_forward.1} parent=1 // pred_fallthru
      _
    // Predicated region
    $region10: #{classifier_forward.1} parent=1 // pred_check
      _
    $region11: #{classifier_forward.1} parent=1 // pred_check_branch
      %37 = sbr.rel (0) target = $region13
    $region12: #{classifier_forward.1} parent=1 // pred_region
      %s39 = ssub.s32 112, 112
      %40 = vsyncadd [#allocation5], %s39
      %s42 = sshll.u32 [#allocation6], 4
      %s43 = int_to_ptr.vmem [resolvable:$true] %s42
      %45 = dma.hbm_to_vmem [thread:$0]  %s2, 112, %s43, [#allocation5]
    $region13: #{classifier_forward.1} parent=1 // pred_fallthru
      _
    // Predicated region
    $region14: #{classifier_forward.1} parent=1 // pred_check
      _
    $region15: #{classifier_forward.1} parent=1 // pred_check_branch
      %47 = sbr.rel (0) target = $region17
    $region16: #{classifier_forward.1} parent=1 // pred_region
      %s49 = ssub.s32 43904, 43904
      %50 = vsyncadd [#allocation8], %s49
      %s51 = sshll.u32 [#allocation7], 4
      %s52 = int_to_ptr.vmem [resolvable:$true] %s51
      %57 = dma.hbm_to_vmem [thread:$0]  %s3, 43904, %s52, [#allocation8], 448, 448, 28
    $region17: #{classifier_forward.1} parent=1 // pred_fallthru
      _
    // Predicated region
    $region18: #{classifier_forward.1} parent=1 // pred_check
      _
    $region19: #{classifier_forward.1} parent=1 // pred_check_branch
      %59 = sbr.rel (0) target = $region21
    $region20: #{classifier_forward.1} parent=1 // pred_region
      %s61 = ssub.s32 112, 112
      %62 = vsyncadd [#allocation8], %s61
      %s64 = sshll.u32 [#allocation9], 4
      %s65 = int_to_ptr.vmem [resolvable:$true] %s64
      %67 = dma.hbm_to_vmem [thread:$0]  %s4, 112, %s65, [#allocation8]
    $region21: #{classifier_forward.1} parent=1 // pred_fallthru
      _
    // Predicated region
    $region22: #{classifier_forward.1} parent=1 // pred_check
      _
    $region23: #{classifier_forward.1} parent=1 // pred_check_branch
      %69 = sbr.rel (0) target = $region25
    $region24: #{classifier_forward.1} parent=1 // pred_region
      %s71 = ssub.s32 112, 112
      %72 = vsyncadd [#allocation11], %s71
      %s74 = sshll.u32 [#allocation10], 4
      %s75 = int_to_ptr.vmem [resolvable:$true] %s74
      %77 = dma.hbm_to_vmem [thread:$0]  %s5, 112, %s75, [#allocation11]
    $region25: #{classifier_forward.1} parent=1 // pred_fallthru
      _
    // Predicated region
    $region26: #{classifier_forward.1} parent=1 // pred_check
      _
    $region27: #{classifier_forward.1} parent=1 // pred_check_branch
      %79 = sbr.rel (0) target = $region29
    $region28: #{classifier_forward.1} parent=1 // pred_region
      %s81 = ssub.s32 112, 112
      %82 = vsyncadd [#allocation11], %s81
      %s84 = sshll.u32 [#allocation12], 4
      %s85 = int_to_ptr.vmem [resolvable:$true] %s84
      %87 = dma.hbm_to_vmem [thread:$0]  %s6, 112, %s85, [#allocation11]
    $region29: #{classifier_forward.1} parent=1 // pred_fallthru
      _
    // Predicated region
    $region30: #{classifier_forward.1} parent=1 // pred_check
      _
    $region31: #{classifier_forward.1} parent=1 // pred_check_branch
      %89 = sbr.rel (0) target = $region33
    $region32: #{classifier_forward.1} parent=1 // pred_region
      %90 = dma.done [#allocation3], 896
    $region33: #{classifier_forward.1} parent=1 // pred_fallthru
      _
    // Predicated region
    $region34: #{classifier_forward.1} parent=1 // pred_check
      _
    $region35: #{classifier_forward.1} parent=1 // pred_check_branch
      %92 = sbr.rel (0) target = $region37
    $region36: #{classifier_forward.1} parent=1 // pred_region
      %93 = dma.done [#allocation5], 112
    $region37: #{classifier_forward.1} parent=1 // pred_fallthru
      _
    // Predicated region
    $region38: #{classifier_forward.1} parent=1 // pred_check
      _
    $region39: #{classifier_forward.1} parent=1 // pred_check_branch
      %95 = sbr.rel (0) target = $region41
    $region40: #{classifier_forward.1} parent=1 // pred_region
      %96 = dma.done [#allocation5], 112
    $region41: #{classifier_forward.1} parent=1 // pred_fallthru
      _
    // Predicated region
    $region42: #{classifier_forward.1} parent=1 // pred_check
      _
    $region43: #{classifier_forward.1} parent=1 // pred_check_branch
      %98 = sbr.rel (0) target = $region45
    $region44: #{classifier_forward.1} parent=1 // pred_region
      %99 = dma.done [#allocation8], 43904
    $region45: #{classifier_forward.1} parent=1 // pred_fallthru
      _
    // Predicated region
    $region46: #{classifier_forward.1} parent=1 // pred_check
      _
    $region47: #{classifier_forward.1} parent=1 // pred_check_branch
      %101 = sbr.rel (0) target = $region49
    $region48: #{classifier_forward.1} parent=1 // pred_region
      %102 = dma.done [#allocation8], 112
    $region49: #{classifier_forward.1} parent=1 // pred_fallthru
      _
    // Predicated region
    $region50: #{classifier_forward.1} parent=1 // pred_check
      _
    $region51: #{classifier_forward.1} parent=1 // pred_check_branch
      %104 = sbr.rel (0) target = $region53
    $region52: #{classifier_forward.1} parent=1 // pred_region
      %105 = dma.done [#allocation11], 112
    $region53: #{classifier_forward.1} parent=1 // pred_fallthru
      _
    // Predicated region
    $region54: #{classifier_forward.1} parent=1 // pred_check
      _
    $region55: #{classifier_forward.1} parent=1 // pred_check_branch
      %107 = sbr.rel (0) target = $region57
    $region56: #{classifier_forward.1} parent=1 // pred_region
      %108 = dma.done [#allocation11], 112
    $region57: #{classifier_forward.1} parent=1 // pred_fallthru
      _
    %v110 = vld [vmem:[#allocation2] sm:$0xff]
    %v111 = vld [vmem:[#allocation2 + $0x8] sm:$0xff]
    %v112 = vld [vmem:[#allocation2 + $0x10] sm:$0xff]
    %v113 = vld [vmem:[#allocation2 + $0x18] sm:$0xff]
    %v114 = vld [vmem:[#allocation2 + $0x20] sm:$0xff]
    %v115 = vld [vmem:[#allocation2 + $0x28] sm:$0xff]
    %v116 = vld [vmem:[#allocation2 + $0x30] sm:$0xff]
    %v117 = vld [vmem:[#allocation4] sm:$0x7f]
    %v118 = vld [vmem:[#allocation6] sm:$0x7f]
    %v119 = vadd.f32 %v110, %v111
    %v120 = vadd.f32 %v119, %v112
    %v121 = vadd.f32 %v120, %v113
    %v122 = vadd.f32 %v121, %v114
    %v123 = vadd.f32 %v122, %v115
    %vm124 = vcmask 130048
    %v125 = vsel %vm124, %v116, 0.0
    %v126 = vadd.f32 %v123, %v125
    %127 = vadd.xlane.f32.xlu0 %v126
    %v128 = vpop.xlane.xlu0 %127
    %v129 = vrcp.pop 784.0
    %v130 = vmul.f32 %v128, %v129
    %v131 = vsub.f32 %v110, %v130
    %v132 = vsub.f32 %v111, %v130
    %v133 = vsub.f32 %v112, %v130
    %v134 = vsub.f32 %v113, %v130
    %v135 = vsub.f32 %v114, %v130
    %v136 = vsub.f32 %v115, %v130
    %v137 = vsub.f32 %v116, %v130
    %v138 = vmul.f32 %v131, %v131
    %v139 = vmul.f32 %v132, %v132
    %v140 = vmul.f32 %v133, %v133
    %v141 = vmul.f32 %v134, %v134
    %v142 = vmul.f32 %v135, %v135
    %v143 = vmul.f32 %v136, %v136
    %v144 = vmul.f32 %v137, %v137
    %v145 = vadd.f32 %v138, %v139
    %v146 = vadd.f32 %v145, %v140
    %v147 = vadd.f32 %v146, %v141
    %v148 = vadd.f32 %v147, %v142
    %v149 = vadd.f32 %v148, %v143
    %v150 = vsel %vm124, %v144, 0.0
    %v151 = vadd.f32 %v149, %v150
    %152 = vadd.xlane.f32.xlu0 %v151
    %v153 = vpop.xlane.xlu0 %152
    %v154 = vmul.f32 %v153, %v129
    %v155 = vadd.f32 %v154, 1e-05
    %v156 = vrsqrt.pop %v155
    %v157 = vmul.f32 %v131, %v156
    %v158 = vmul.f32 %v132, %v156
    %v159 = vmul.f32 %v133, %v156
    %v160 = vmul.f32 %v134, %v156
    %v161 = vmul.f32 %v135, %v156
    %v162 = vmul.f32 %v136, %v156
    %v163 = vmul.f32 %v137, %v156
    %v165 = vlaneseq
    %v166 = vshrl.u32 %v165, 7
    %v167 = vsub.s32 0, %v166
    %v168 = vrot.slane %v117, %v167
    %v169 = vlaneseq
    %v170 = vshrl.u32 %v169, 7
    %v171 = vsub.s32 1, %v170
    %v172 = vrot.slane %v117, %v171
    %v173 = vlaneseq
    %v174 = vshrl.u32 %v173, 7
    %v175 = vsub.s32 2, %v174
    %v176 = vrot.slane %v117, %v175
    %v177 = vlaneseq
    %v178 = vshrl.u32 %v177, 7
    %v179 = vsub.s32 3, %v178
    %v180 = vrot.slane %v117, %v179
    %v181 = vlaneseq
    %v182 = vshrl.u32 %v181, 7
    %v183 = vsub.s32 4, %v182
    %v184 = vrot.slane %v117, %v183
    %v185 = vlaneseq
    %v186 = vshrl.u32 %v185, 7
    %v187 = vsub.s32 5, %v186
    %v188 = vrot.slane %v117, %v187
    %v189 = vlaneseq
    %v190 = vshrl.u32 %v189, 7
    %v191 = vsub.s32 6, %v190
    %v192 = vrot.slane %v117, %v191
    %v200 = vmul.f32 %v157, %v168
    %v201 = vmul.f32 %v158, %v172
    %v202 = vmul.f32 %v159, %v176
    %v203 = vmul.f32 %v160, %v180
    %v204 = vmul.f32 %v161, %v184
    %v205 = vmul.f32 %v162, %v188
    %v206 = vmul.f32 %v163, %v192
    %v208 = vlaneseq
    %v209 = vshrl.u32 %v208, 7
    %v210 = vsub.s32 0, %v209
    %v211 = vrot.slane %v118, %v210
    %v212 = vlaneseq
    %v213 = vshrl.u32 %v212, 7
    %v214 = vsub.s32 1, %v213
    %v215 = vrot.slane %v118, %v214
    %v216 = vlaneseq
    %v217 = vshrl.u32 %v216, 7
    %v218 = vsub.s32 2, %v217
    %v219 = vrot.slane %v118, %v218
    %v220 = vlaneseq
    %v221 = vshrl.u32 %v220, 7
    %v222 = vsub.s32 3, %v221
    %v223 = vrot.slane %v118, %v222
    %v224 = vlaneseq
    %v225 = vshrl.u32 %v224, 7
    %v226 = vsub.s32 4, %v225
    %v227 = vrot.slane %v118, %v226
    %v228 = vlaneseq
    %v229 = vshrl.u32 %v228, 7
    %v230 = vsub.s32 5, %v229
    %v231 = vrot.slane %v118, %v230
    %v232 = vlaneseq
    %v233 = vshrl.u32 %v232, 7
    %v234 = vsub.s32 6, %v233
    %v235 = vrot.slane %v118, %v234
    %v243 = vadd.f32 %v200, %v211
    %v244 = vadd.f32 %v201, %v215
    %v245 = vadd.f32 %v202, %v219
    %v246 = vadd.f32 %v203, %v223
    %v247 = vadd.f32 %v204, %v227
    %v248 = vadd.f32 %v205, %v231
    %v249 = vadd.f32 %v206, %v235
    %v250 = vpack.c.bf16 %v243, %v243
    %v251 = vpack.c.bf16 %v244, %v244
    %v252 = vpack.c.bf16 %v245, %v245
    %v253 = vpack.c.bf16 %v246, %v246
    %v254 = vpack.c.bf16 %v247, %v247
    %v255 = vpack.c.bf16 %v248, %v248
    %v256 = vpack.c.bf16 %v249, %v249
    %v257 = vld [vmem:[#allocation7] sm:$0xff]
    %v258 = vld [vmem:[#allocation7 + $0x8] sm:$0xff]
    %v259 = vld [vmem:[#allocation7 + $0x10] sm:$0xff]
    %v260 = vld [vmem:[#allocation7 + $0x18] sm:$0xf]
    %v261 = vld [vmem:[#allocation7 + $0x1c] sm:$0xff]
    %v262 = vld [vmem:[#allocation7 + $0x24] sm:$0xff]
    %v263 = vld [vmem:[#allocation7 + $0x2c] sm:$0xff]
    %v264 = vld [vmem:[#allocation7 + $0x34] sm:$0xf]
    %v265 = vld [vmem:[#allocation7 + $0x38] sm:$0xff]
    %v266 = vld [vmem:[#allocation7 + $0x40] sm:$0xff]
    %v267 = vld [vmem:[#allocation7 + $0x48] sm:$0xff]
    %v268 = vld [vmem:[#allocation7 + $0x50] sm:$0xf]
    %v269 = vld [vmem:[#allocation7 + $0x54] sm:$0xff]
    %v270 = vld [vmem:[#allocation7 + $0x5c] sm:$0xff]
    %v271 = vld [vmem:[#allocation7 + $0x64] sm:$0xff]
    %v272 = vld [vmem:[#allocation7 + $0x6c] sm:$0xf]
    %v273 = vld [vmem:[#allocation7 + $0x70] sm:$0xff]
    %v274 = vld [vmem:[#allocation7 + $0x78] sm:$0xff]
    %v275 = vld [vmem:[#allocation7 + $0x80] sm:$0xff]
    %v276 = vld [vmem:[#allocation7 + $0x88] sm:$0xf]
    %v277 = vld [vmem:[#allocation7 + $0x8c] sm:$0xff]
    %v278 = vld [vmem:[#allocation7 + $0x94] sm:$0xff]
    %v279 = vld [vmem:[#allocation7 + $0x9c] sm:$0xff]
    %v280 = vld [vmem:[#allocation7 + $0xa4] sm:$0xf]
    %v281 = vld [vmem:[#allocation7 + $0xa8] sm:$0xff]
    %v282 = vld [vmem:[#allocation7 + $0xb0] sm:$0xff]
    %v283 = vld [vmem:[#allocation7 + $0xb8] sm:$0xff]
    %v284 = vld [vmem:[#allocation7 + $0xc0] sm:$0xf]
    %v285 = vld [vmem:[#allocation7 + $0xc4] sm:$0xff]
    %v286 = vld [vmem:[#allocation7 + $0xcc] sm:$0xff]
    %v287 = vld [vmem:[#allocation7 + $0xd4] sm:$0xff]
    %v288 = vld [vmem:[#allocation7 + $0xdc] sm:$0xf]
    %v289 = vld [vmem:[#allocation7 + $0xe0] sm:$0xff]
    %v290 = vld [vmem:[#allocation7 + $0xe8] sm:$0xff]
    %v291 = vld [vmem:[#allocation7 + $0xf0] sm:$0xff]
    %v292 = vld [vmem:[#allocation7 + $0xf8] sm:$0xf]
    %v293 = vld [vmem:[#allocation7 + $0xfc] sm:$0xff]
    %v294 = vld [vmem:[#allocation7 + $0x104] sm:$0xff]
    %v295 = vld [vmem:[#allocation7 + $0x10c] sm:$0xff]
    %v296 = vld [vmem:[#allocation7 + $0x114] sm:$0xf]
    %v297 = vld [vmem:[#allocation7 + $0x118] sm:$0xff]
    %v298 = vld [vmem:[#allocation7 + $0x120] sm:$0xff]
    %v299 = vld [vmem:[#allocation7 + $0x128] sm:$0xff]
    %v300 = vld [vmem:[#allocation7 + $0x130] sm:$0xf]
    %v301 = vld [vmem:[#allocation7 + $0x134] sm:$0xff]
    %v302 = vld [vmem:[#allocation7 + $0x13c] sm:$0xff]
    %v303 = vld [vmem:[#allocation7 + $0x144] sm:$0xff]
    %v304 = vld [vmem:[#allocation7 + $0x14c] sm:$0xf]
    %v305 = vld [vmem:[#allocation7 + $0x150] sm:$0xff]
    %v306 = vld [vmem:[#allocation7 + $0x158] sm:$0xff]
    %v307 = vld [vmem:[#allocation7 + $0x160] sm:$0xff]
    %v308 = vld [vmem:[#allocation7 + $0x168] sm:$0xf]
    %v309 = vld [vmem:[#allocation7 + $0x16c] sm:$0xff]
    %v310 = vld [vmem:[#allocation7 + $0x174] sm:$0xff]
    %v311 = vld [vmem:[#allocation7 + $0x17c] sm:$0xff]
    %v312 = vld [vmem:[#allocation7 + $0x184] sm:$0xf]
    %v313 = vld [vmem:[#allocation7 + $0x188] sm:$0xff]
    %v314 = vld [vmem:[#allocation7 + $0x190] sm:$0xff]
    %v315 = vld [vmem:[#allocation7 + $0x198] sm:$0xff]
    %v316 = vld [vmem:[#allocation7 + $0x1a0] sm:$0xf]
    %v317 = vld [vmem:[#allocation7 + $0x1a4] sm:$0xff]
    %v318 = vld [vmem:[#allocation7 + $0x1ac] sm:$0xff]
    %v319 = vld [vmem:[#allocation7 + $0x1b4] sm:$0xff]
    %v320 = vld [vmem:[#allocation7 + $0x1bc] sm:$0xf]
    %v321 = vld [vmem:[#allocation7 + $0x1c0] sm:$0xff]
    %v322 = vld [vmem:[#allocation7 + $0x1c8] sm:$0xff]
    %v323 = vld [vmem:[#allocation7 + $0x1d0] sm:$0xff]
    %v324 = vld [vmem:[#allocation7 + $0x1d8] sm:$0xf]
    %v325 = vld [vmem:[#allocation7 + $0x1dc] sm:$0xff]
    %v326 = vld [vmem:[#allocation7 + $0x1e4] sm:$0xff]
    %v327 = vld [vmem:[#allocation7 + $0x1ec] sm:$0xff]
    %v328 = vld [vmem:[#allocation7 + $0x1f4] sm:$0xf]
    %v329 = vld [vmem:[#allocation7 + $0x1f8] sm:$0xff]
    %v330 = vld [vmem:[#allocation7 + $0x200] sm:$0xff]
    %v331 = vld [vmem:[#allocation7 + $0x208] sm:$0xff]
    %v332 = vld [vmem:[#allocation7 + $0x210] sm:$0xf]
    %v333 = vld [vmem:[#allocation7 + $0x214] sm:$0xff]
    %v334 = vld [vmem:[#allocation7 + $0x21c] sm:$0xff]
    %v335 = vld [vmem:[#allocation7 + $0x224] sm:$0xff]
    %v336 = vld [vmem:[#allocation7 + $0x22c] sm:$0xf]
    %v337 = vld [vmem:[#allocation7 + $0x230] sm:$0xff]
    %v338 = vld [vmem:[#allocation7 + $0x238] sm:$0xff]
    %v339 = vld [vmem:[#allocation7 + $0x240] sm:$0xff]
    %v340 = vld [vmem:[#allocation7 + $0x248] sm:$0xf]
    %v341 = vld [vmem:[#allocation7 + $0x24c] sm:$0xff]
    %v342 = vld [vmem:[#allocation7 + $0x254] sm:$0xff]
    %v343 = vld [vmem:[#allocation7 + $0x25c] sm:$0xff]
    %v344 = vld [vmem:[#allocation7 + $0x264] sm:$0xf]
    %v345 = vld [vmem:[#allocation7 + $0x268] sm:$0xff]
    %v346 = vld [vmem:[#allocation7 + $0x270] sm:$0xff]
    %v347 = vld [vmem:[#allocation7 + $0x278] sm:$0xff]
    %v348 = vld [vmem:[#allocation7 + $0x280] sm:$0xf]
    %v349 = vld [vmem:[#allocation7 + $0x284] sm:$0xff]
    %v350 = vld [vmem:[#allocation7 + $0x28c] sm:$0xff]
    %v351 = vld [vmem:[#allocation7 + $0x294] sm:$0xff]
    %v352 = vld [vmem:[#allocation7 + $0x29c] sm:$0xf]
    %v353 = vld [vmem:[#allocation7 + $0x2a0] sm:$0xff]
    %v354 = vld [vmem:[#allocation7 + $0x2a8] sm:$0xff]
    %v355 = vld [vmem:[#allocation7 + $0x2b0] sm:$0xff]
    %v356 = vld [vmem:[#allocation7 + $0x2b8] sm:$0xf]
    %v357 = vld [vmem:[#allocation7 + $0x2bc] sm:$0xff]
    %v358 = vld [vmem:[#allocation7 + $0x2c4] sm:$0xff]
    %v359 = vld [vmem:[#allocation7 + $0x2cc] sm:$0xff]
    %v360 = vld [vmem:[#allocation7 + $0x2d4] sm:$0xf]
    %v361 = vld [vmem:[#allocation7 + $0x2d8] sm:$0xff]
    %v362 = vld [vmem:[#allocation7 + $0x2e0] sm:$0xff]
    %v363 = vld [vmem:[#allocation7 + $0x2e8] sm:$0xff]
    %v364 = vld [vmem:[#allocation7 + $0x2f0] sm:$0xf]
    %v365 = vld [vmem:[#allocation7 + $0x2f4] sm:$0xff]
    %v366 = vld [vmem:[#allocation7 + $0x2fc] sm:$0xff]
    %v367 = vld [vmem:[#allocation7 + $0x304] sm:$0xff]
    %v368 = vld [vmem:[#allocation7 + $0x30c] sm:$0xf]
    %v369 = vld [vmem:[#allocation7 + $0x310] sm:$0xff]
    %v370 = vld [vmem:[#allocation7 + $0x318] sm:$0xff]
    %v371 = vld [vmem:[#allocation7 + $0x320] sm:$0xff]
    %v372 = vld [vmem:[#allocation7 + $0x328] sm:$0xf]
    %v373 = vld [vmem:[#allocation7 + $0x32c] sm:$0xff]
    %v374 = vld [vmem:[#allocation7 + $0x334] sm:$0xff]
    %v375 = vld [vmem:[#allocation7 + $0x33c] sm:$0xff]
    %v376 = vld [vmem:[#allocation7 + $0x344] sm:$0xf]
    %v377 = vld [vmem:[#allocation7 + $0x348] sm:$0xff]
    %v378 = vld [vmem:[#allocation7 + $0x350] sm:$0xff]
    %v379 = vld [vmem:[#allocation7 + $0x358] sm:$0xff]
    %v380 = vld [vmem:[#allocation7 + $0x360] sm:$0xf]
    %v381 = vld [vmem:[#allocation7 + $0x364] sm:$0xff]
    %v382 = vld [vmem:[#allocation7 + $0x36c] sm:$0xff]
    %v383 = vld [vmem:[#allocation7 + $0x374] sm:$0xff]
    %v384 = vld [vmem:[#allocation7 + $0x37c] sm:$0xf]
    %v385 = vld [vmem:[#allocation7 + $0x380] sm:$0xff]
    %v386 = vld [vmem:[#allocation7 + $0x388] sm:$0xff]
    %v387 = vld [vmem:[#allocation7 + $0x390] sm:$0xff]
    %v388 = vld [vmem:[#allocation7 + $0x398] sm:$0xf]
    %v389 = vld [vmem:[#allocation7 + $0x39c] sm:$0xff]
    %v390 = vld [vmem:[#allocation7 + $0x3a4] sm:$0xff]
    %v391 = vld [vmem:[#allocation7 + $0x3ac] sm:$0xff]
    %v392 = vld [vmem:[#allocation7 + $0x3b4] sm:$0xf]
    %v393 = vld [vmem:[#allocation7 + $0x3b8] sm:$0xff]
    %v394 = vld [vmem:[#allocation7 + $0x3c0] sm:$0xff]
    %v395 = vld [vmem:[#allocation7 + $0x3c8] sm:$0xff]
    %v396 = vld [vmem:[#allocation7 + $0x3d0] sm:$0xf]
    %v397 = vld [vmem:[#allocation7 + $0x3d4] sm:$0xff]
    %v398 = vld [vmem:[#allocation7 + $0x3dc] sm:$0xff]
    %v399 = vld [vmem:[#allocation7 + $0x3e4] sm:$0xff]
    %v400 = vld [vmem:[#allocation7 + $0x3ec] sm:$0xf]
    %v401 = vld [vmem:[#allocation7 + $0x3f0] sm:$0xff]
    %v402 = vld [vmem:[#allocation7 + $0x3f8] sm:$0xff]
    %v403 = vld [vmem:[#allocation7 + $0x400] sm:$0xff]
    %v404 = vld [vmem:[#allocation7 + $0x408] sm:$0xf]
    %v405 = vld [vmem:[#allocation7 + $0x40c] sm:$0xff]
    %v406 = vld [vmem:[#allocation7 + $0x414] sm:$0xff]
    %v407 = vld [vmem:[#allocation7 + $0x41c] sm:$0xff]
    %v408 = vld [vmem:[#allocation7 + $0x424] sm:$0xf]
    %v409 = vld [vmem:[#allocation7 + $0x428] sm:$0xff]
    %v410 = vld [vmem:[#allocation7 + $0x430] sm:$0xff]
    %v411 = vld [vmem:[#allocation7 + $0x438] sm:$0xff]
    %v412 = vld [vmem:[#allocation7 + $0x440] sm:$0xf]
    %v413 = vld [vmem:[#allocation7 + $0x444] sm:$0xff]
    %v414 = vld [vmem:[#allocation7 + $0x44c] sm:$0xff]
    %v415 = vld [vmem:[#allocation7 + $0x454] sm:$0xff]
    %v416 = vld [vmem:[#allocation7 + $0x45c] sm:$0xf]
    %v417 = vld [vmem:[#allocation7 + $0x460] sm:$0xff]
    %v418 = vld [vmem:[#allocation7 + $0x468] sm:$0xff]
    %v419 = vld [vmem:[#allocation7 + $0x470] sm:$0xff]
    %v420 = vld [vmem:[#allocation7 + $0x478] sm:$0xf]
    %v421 = vld [vmem:[#allocation7 + $0x47c] sm:$0xff]
    %v422 = vld [vmem:[#allocation7 + $0x484] sm:$0xff]
    %v423 = vld [vmem:[#allocation7 + $0x48c] sm:$0xff]
    %v424 = vld [vmem:[#allocation7 + $0x494] sm:$0xf]
    %v425 = vld [vmem:[#allocation7 + $0x498] sm:$0xff]
    %v426 = vld [vmem:[#allocation7 + $0x4a0] sm:$0xff]
    %v427 = vld [vmem:[#allocation7 + $0x4a8] sm:$0xff]
    %v428 = vld [vmem:[#allocation7 + $0x4b0] sm:$0xf]
    %v429 = vld [vmem:[#allocation7 + $0x4b4] sm:$0xff]
    %v430 = vld [vmem:[#allocation7 + $0x4bc] sm:$0xff]
    %v431 = vld [vmem:[#allocation7 + $0x4c4] sm:$0xff]
    %v432 = vld [vmem:[#allocation7 + $0x4cc] sm:$0xf]
    %v433 = vld [vmem:[#allocation7 + $0x4d0] sm:$0xff]
    %v434 = vld [vmem:[#allocation7 + $0x4d8] sm:$0xff]
    %v435 = vld [vmem:[#allocation7 + $0x4e0] sm:$0xff]
    %v436 = vld [vmem:[#allocation7 + $0x4e8] sm:$0xf]
    %v437 = vld [vmem:[#allocation7 + $0x4ec] sm:$0xff]
    %v438 = vld [vmem:[#allocation7 + $0x4f4] sm:$0xff]
    %v439 = vld [vmem:[#allocation7 + $0x4fc] sm:$0xff]
    %v440 = vld [vmem:[#allocation7 + $0x504] sm:$0xf]
    %v441 = vld [vmem:[#allocation7 + $0x508] sm:$0xff]
    %v442 = vld [vmem:[#allocation7 + $0x510] sm:$0xff]
    %v443 = vld [vmem:[#allocation7 + $0x518] sm:$0xff]
    %v444 = vld [vmem:[#allocation7 + $0x520] sm:$0xf]
    %v445 = vld [vmem:[#allocation7 + $0x524] sm:$0xff]
    %v446 = vld [vmem:[#allocation7 + $0x52c] sm:$0xff]
    %v447 = vld [vmem:[#allocation7 + $0x534] sm:$0xff]
    %v448 = vld [vmem:[#allocation7 + $0x53c] sm:$0xf]
    %v449 = vld [vmem:[#allocation7 + $0x540] sm:$0xff]
    %v450 = vld [vmem:[#allocation7 + $0x548] sm:$0xff]
    %v451 = vld [vmem:[#allocation7 + $0x550] sm:$0xff]
    %v452 = vld [vmem:[#allocation7 + $0x558] sm:$0xf]
    %v453 = vld [vmem:[#allocation7 + $0x55c] sm:$0xff]
    %v454 = vld [vmem:[#allocation7 + $0x564] sm:$0xff]
    %v455 = vld [vmem:[#allocation7 + $0x56c] sm:$0xff]
    %v456 = vld [vmem:[#allocation7 + $0x574] sm:$0xf]
    %v457 = vld [vmem:[#allocation7 + $0x578] sm:$0xff]
    %v458 = vld [vmem:[#allocation7 + $0x580] sm:$0xff]
    %v459 = vld [vmem:[#allocation7 + $0x588] sm:$0xff]
    %v460 = vld [vmem:[#allocation7 + $0x590] sm:$0xf]
    %v461 = vld [vmem:[#allocation7 + $0x594] sm:$0xff]
    %v462 = vld [vmem:[#allocation7 + $0x59c] sm:$0xff]
    %v463 = vld [vmem:[#allocation7 + $0x5a4] sm:$0xff]
    %v464 = vld [vmem:[#allocation7 + $0x5ac] sm:$0xf]
    %v465 = vld [vmem:[#allocation7 + $0x5b0] sm:$0xff]
    %v466 = vld [vmem:[#allocation7 + $0x5b8] sm:$0xff]
    %v467 = vld [vmem:[#allocation7 + $0x5c0] sm:$0xff]
    %v468 = vld [vmem:[#allocation7 + $0x5c8] sm:$0xf]
    %v469 = vld [vmem:[#allocation7 + $0x5cc] sm:$0xff]
    %v470 = vld [vmem:[#allocation7 + $0x5d4] sm:$0xff]
    %v471 = vld [vmem:[#allocation7 + $0x5dc] sm:$0xff]
    %v472 = vld [vmem:[#allocation7 + $0x5e4] sm:$0xf]
    %v473 = vld [vmem:[#allocation7 + $0x5e8] sm:$0xff]
    %v474 = vld [vmem:[#allocation7 + $0x5f0] sm:$0xff]
    %v475 = vld [vmem:[#allocation7 + $0x5f8] sm:$0xff]
    %v476 = vld [vmem:[#allocation7 + $0x600] sm:$0xf]
    %v477 = vld [vmem:[#allocation7 + $0x604] sm:$0xff]
    %v478 = vld [vmem:[#allocation7 + $0x60c] sm:$0xff]
    %v479 = vld [vmem:[#allocation7 + $0x614] sm:$0xff]
    %v480 = vld [vmem:[#allocation7 + $0x61c] sm:$0xf]
    %v481 = vld [vmem:[#allocation7 + $0x620] sm:$0xff]
    %v482 = vld [vmem:[#allocation7 + $0x628] sm:$0xff]
    %v483 = vld [vmem:[#allocation7 + $0x630] sm:$0xff]
    %v484 = vld [vmem:[#allocation7 + $0x638] sm:$0xf]
    %v485 = vld [vmem:[#allocation7 + $0x63c] sm:$0xff]
    %v486 = vld [vmem:[#allocation7 + $0x644] sm:$0xff]
    %v487 = vld [vmem:[#allocation7 + $0x64c] sm:$0xff]
    %v488 = vld [vmem:[#allocation7 + $0x654] sm:$0xf]
    %v489 = vld [vmem:[#allocation7 + $0x658] sm:$0xff]
    %v490 = vld [vmem:[#allocation7 + $0x660] sm:$0xff]
    %v491 = vld [vmem:[#allocation7 + $0x668] sm:$0xff]
    %v492 = vld [vmem:[#allocation7 + $0x670] sm:$0xf]
    %v493 = vld [vmem:[#allocation7 + $0x674] sm:$0xff]
    %v494 = vld [vmem:[#allocation7 + $0x67c] sm:$0xff]
    %v495 = vld [vmem:[#allocation7 + $0x684] sm:$0xff]
    %v496 = vld [vmem:[#allocation7 + $0x68c] sm:$0xf]
    %v497 = vld [vmem:[#allocation7 + $0x690] sm:$0xff]
    %v498 = vld [vmem:[#allocation7 + $0x698] sm:$0xff]
    %v499 = vld [vmem:[#allocation7 + $0x6a0] sm:$0xff]
    %v500 = vld [vmem:[#allocation7 + $0x6a8] sm:$0xf]
    %v501 = vld [vmem:[#allocation7 + $0x6ac] sm:$0xff]
    %v502 = vld [vmem:[#allocation7 + $0x6b4] sm:$0xff]
    %v503 = vld [vmem:[#allocation7 + $0x6bc] sm:$0xff]
    %v504 = vld [vmem:[#allocation7 + $0x6c4] sm:$0xf]
    %v505 = vld [vmem:[#allocation7 + $0x6c8] sm:$0xff]
    %v506 = vld [vmem:[#allocation7 + $0x6d0] sm:$0xff]
    %v507 = vld [vmem:[#allocation7 + $0x6d8] sm:$0xff]
    %v508 = vld [vmem:[#allocation7 + $0x6e0] sm:$0xf]
    %v509 = vld [vmem:[#allocation7 + $0x6e4] sm:$0xff]
    %v510 = vld [vmem:[#allocation7 + $0x6ec] sm:$0xff]
    %v511 = vld [vmem:[#allocation7 + $0x6f4] sm:$0xff]
    %v512 = vld [vmem:[#allocation7 + $0x6fc] sm:$0xf]
    %v513 = vld [vmem:[#allocation7 + $0x700] sm:$0xff]
    %v514 = vld [vmem:[#allocation7 + $0x708] sm:$0xff]
    %v515 = vld [vmem:[#allocation7 + $0x710] sm:$0xff]
    %v516 = vld [vmem:[#allocation7 + $0x718] sm:$0xf]
    %v517 = vld [vmem:[#allocation7 + $0x71c] sm:$0xff]
    %v518 = vld [vmem:[#allocation7 + $0x724] sm:$0xff]
    %v519 = vld [vmem:[#allocation7 + $0x72c] sm:$0xff]
    %v520 = vld [vmem:[#allocation7 + $0x734] sm:$0xf]
    %v521 = vld [vmem:[#allocation7 + $0x738] sm:$0xff]
    %v522 = vld [vmem:[#allocation7 + $0x740] sm:$0xff]
    %v523 = vld [vmem:[#allocation7 + $0x748] sm:$0xff]
    %v524 = vld [vmem:[#allocation7 + $0x750] sm:$0xf]
    %v525 = vld [vmem:[#allocation7 + $0x754] sm:$0xff]
    %v526 = vld [vmem:[#allocation7 + $0x75c] sm:$0xff]
    %v527 = vld [vmem:[#allocation7 + $0x764] sm:$0xff]
    %v528 = vld [vmem:[#allocation7 + $0x76c] sm:$0xf]
    %v529 = vld [vmem:[#allocation7 + $0x770] sm:$0xff]
    %v530 = vld [vmem:[#allocation7 + $0x778] sm:$0xff]
    %v531 = vld [vmem:[#allocation7 + $0x780] sm:$0xff]
    %v532 = vld [vmem:[#allocation7 + $0x788] sm:$0xf]
    %v533 = vld [vmem:[#allocation7 + $0x78c] sm:$0xff]
    %v534 = vld [vmem:[#allocation7 + $0x794] sm:$0xff]
    %v535 = vld [vmem:[#allocation7 + $0x79c] sm:$0xff]
    %v536 = vld [vmem:[#allocation7 + $0x7a4] sm:$0xf]
    %v537 = vld [vmem:[#allocation7 + $0x7a8] sm:$0xff]
    %v538 = vld [vmem:[#allocation7 + $0x7b0] sm:$0xff]
    %v539 = vld [vmem:[#allocation7 + $0x7b8] sm:$0xff]
    %v540 = vld [vmem:[#allocation7 + $0x7c0] sm:$0xf]
    %v541 = vld [vmem:[#allocation7 + $0x7c4] sm:$0xff]
    %v542 = vld [vmem:[#allocation7 + $0x7cc] sm:$0xff]
    %v543 = vld [vmem:[#allocation7 + $0x7d4] sm:$0xff]
    %v544 = vld [vmem:[#allocation7 + $0x7dc] sm:$0xf]
    %v545 = vld [vmem:[#allocation7 + $0x7e0] sm:$0xff]
    %v546 = vld [vmem:[#allocation7 + $0x7e8] sm:$0xff]
    %v547 = vld [vmem:[#allocation7 + $0x7f0] sm:$0xff]
    %v548 = vld [vmem:[#allocation7 + $0x7f8] sm:$0xf]
    %v549 = vld [vmem:[#allocation7 + $0x7fc] sm:$0xff]
    %v550 = vld [vmem:[#allocation7 + $0x804] sm:$0xff]
    %v551 = vld [vmem:[#allocation7 + $0x80c] sm:$0xff]
    %v552 = vld [vmem:[#allocation7 + $0x814] sm:$0xf]
    %v553 = vld [vmem:[#allocation7 + $0x818] sm:$0xff]
    %v554 = vld [vmem:[#allocation7 + $0x820] sm:$0xff]
    %v555 = vld [vmem:[#allocation7 + $0x828] sm:$0xff]
    %v556 = vld [vmem:[#allocation7 + $0x830] sm:$0xf]
    %v557 = vld [vmem:[#allocation7 + $0x834] sm:$0xff]
    %v558 = vld [vmem:[#allocation7 + $0x83c] sm:$0xff]
    %v559 = vld [vmem:[#allocation7 + $0x844] sm:$0xff]
    %v560 = vld [vmem:[#allocation7 + $0x84c] sm:$0xf]
    %v561 = vld [vmem:[#allocation7 + $0x850] sm:$0xff]
    %v562 = vld [vmem:[#allocation7 + $0x858] sm:$0xff]
    %v563 = vld [vmem:[#allocation7 + $0x860] sm:$0xff]
    %v564 = vld [vmem:[#allocation7 + $0x868] sm:$0xf]
    %v565 = vld [vmem:[#allocation7 + $0x86c] sm:$0xff]
    %v566 = vld [vmem:[#allocation7 + $0x874] sm:$0xff]
    %v567 = vld [vmem:[#allocation7 + $0x87c] sm:$0xff]
    %v568 = vld [vmem:[#allocation7 + $0x884] sm:$0xf]
    %v569 = vld [vmem:[#allocation7 + $0x888] sm:$0xff]
    %v570 = vld [vmem:[#allocation7 + $0x890] sm:$0xff]
    %v571 = vld [vmem:[#allocation7 + $0x898] sm:$0xff]
    %v572 = vld [vmem:[#allocation7 + $0x8a0] sm:$0xf]
    %v573 = vld [vmem:[#allocation7 + $0x8a4] sm:$0xff]
    %v574 = vld [vmem:[#allocation7 + $0x8ac] sm:$0xff]
    %v575 = vld [vmem:[#allocation7 + $0x8b4] sm:$0xff]
    %v576 = vld [vmem:[#allocation7 + $0x8bc] sm:$0xf]
    %v577 = vld [vmem:[#allocation7 + $0x8c0] sm:$0xff]
    %v578 = vld [vmem:[#allocation7 + $0x8c8] sm:$0xff]
    %v579 = vld [vmem:[#allocation7 + $0x8d0] sm:$0xff]
    %v580 = vld [vmem:[#allocation7 + $0x8d8] sm:$0xf]
    %v581 = vld [vmem:[#allocation7 + $0x8dc] sm:$0xff]
    %v582 = vld [vmem:[#allocation7 + $0x8e4] sm:$0xff]
    %v583 = vld [vmem:[#allocation7 + $0x8ec] sm:$0xff]
    %v584 = vld [vmem:[#allocation7 + $0x8f4] sm:$0xf]
    %v585 = vld [vmem:[#allocation7 + $0x8f8] sm:$0xff]
    %v586 = vld [vmem:[#allocation7 + $0x900] sm:$0xff]
    %v587 = vld [vmem:[#allocation7 + $0x908] sm:$0xff]
    %v588 = vld [vmem:[#allocation7 + $0x910] sm:$0xf]
    %v589 = vld [vmem:[#allocation7 + $0x914] sm:$0xff]
    %v590 = vld [vmem:[#allocation7 + $0x91c] sm:$0xff]
    %v591 = vld [vmem:[#allocation7 + $0x924] sm:$0xff]
    %v592 = vld [vmem:[#allocation7 + $0x92c] sm:$0xf]
    %v593 = vld [vmem:[#allocation7 + $0x930] sm:$0xff]
    %v594 = vld [vmem:[#allocation7 + $0x938] sm:$0xff]
    %v595 = vld [vmem:[#allocation7 + $0x940] sm:$0xff]
    %v596 = vld [vmem:[#allocation7 + $0x948] sm:$0xf]
    %v597 = vld [vmem:[#allocation7 + $0x94c] sm:$0xff]
    %v598 = vld [vmem:[#allocation7 + $0x954] sm:$0xff]
    %v599 = vld [vmem:[#allocation7 + $0x95c] sm:$0xff]
    %v600 = vld [vmem:[#allocation7 + $0x964] sm:$0xf]
    %v601 = vld [vmem:[#allocation7 + $0x968] sm:$0xff]
    %v602 = vld [vmem:[#allocation7 + $0x970] sm:$0xff]
    %v603 = vld [vmem:[#allocation7 + $0x978] sm:$0xff]
    %v604 = vld [vmem:[#allocation7 + $0x980] sm:$0xf]
    %v605 = vld [vmem:[#allocation7 + $0x984] sm:$0xff]
    %v606 = vld [vmem:[#allocation7 + $0x98c] sm:$0xff]
    %v607 = vld [vmem:[#allocation7 + $0x994] sm:$0xff]
    %v608 = vld [vmem:[#allocation7 + $0x99c] sm:$0xf]
    %v609 = vld [vmem:[#allocation7 + $0x9a0] sm:$0xff]
    %v610 = vld [vmem:[#allocation7 + $0x9a8] sm:$0xff]
    %v611 = vld [vmem:[#allocation7 + $0x9b0] sm:$0xff]
    %v612 = vld [vmem:[#allocation7 + $0x9b8] sm:$0xf]
    %v613 = vld [vmem:[#allocation7 + $0x9bc] sm:$0xff]
    %v614 = vld [vmem:[#allocation7 + $0x9c4] sm:$0xff]
    %v615 = vld [vmem:[#allocation7 + $0x9cc] sm:$0xff]
    %v616 = vld [vmem:[#allocation7 + $0x9d4] sm:$0xf]
    %v617 = vld [vmem:[#allocation7 + $0x9d8] sm:$0xff]
    %v618 = vld [vmem:[#allocation7 + $0x9e0] sm:$0xff]
    %v619 = vld [vmem:[#allocation7 + $0x9e8] sm:$0xff]
    %v620 = vld [vmem:[#allocation7 + $0x9f0] sm:$0xf]
    %v621 = vld [vmem:[#allocation7 + $0x9f4] sm:$0xff]
    %v622 = vld [vmem:[#allocation7 + $0x9fc] sm:$0xff]
    %v623 = vld [vmem:[#allocation7 + $0xa04] sm:$0xff]
    %v624 = vld [vmem:[#allocation7 + $0xa0c] sm:$0xf]
    %v625 = vld [vmem:[#allocation7 + $0xa10] sm:$0xff]
    %v626 = vld [vmem:[#allocation7 + $0xa18] sm:$0xff]
    %v627 = vld [vmem:[#allocation7 + $0xa20] sm:$0xff]
    %v628 = vld [vmem:[#allocation7 + $0xa28] sm:$0xf]
    %v629 = vld [vmem:[#allocation7 + $0xa2c] sm:$0xff]
    %v630 = vld [vmem:[#allocation7 + $0xa34] sm:$0xff]
    %v631 = vld [vmem:[#allocation7 + $0xa3c] sm:$0xff]
    %v632 = vld [vmem:[#allocation7 + $0xa44] sm:$0xf]
    %v633 = vld [vmem:[#allocation7 + $0xa48] sm:$0xff]
    %v634 = vld [vmem:[#allocation7 + $0xa50] sm:$0xff]
    %v635 = vld [vmem:[#allocation7 + $0xa58] sm:$0xff]
    %v636 = vld [vmem:[#allocation7 + $0xa60] sm:$0xf]
    %v637 = vld [vmem:[#allocation7 + $0xa64] sm:$0xff]
    %v638 = vld [vmem:[#allocation7 + $0xa6c] sm:$0xff]
    %v639 = vld [vmem:[#allocation7 + $0xa74] sm:$0xff]
    %v640 = vld [vmem:[#allocation7 + $0xa7c] sm:$0xf]
    %v641 = vld [vmem:[#allocation7 + $0xa80] sm:$0xff]
    %v642 = vld [vmem:[#allocation7 + $0xa88] sm:$0xff]
    %v643 = vld [vmem:[#allocation7 + $0xa90] sm:$0xff]
    %v644 = vld [vmem:[#allocation7 + $0xa98] sm:$0xf]
    %v645 = vld [vmem:[#allocation7 + $0xa9c] sm:$0xff]
    %v646 = vld [vmem:[#allocation7 + $0xaa4] sm:$0xff]
    %v647 = vld [vmem:[#allocation7 + $0xaac] sm:$0xff]
    %v648 = vld [vmem:[#allocation7 + $0xab4] sm:$0xf]
    %v1041 = vunpack.c.l.b16 %v257
    %v1042 = vunpack.c.h.b16 %v257
    %v1043 = vunpack.c.l.b16 %v258
    %v1044 = vunpack.c.h.b16 %v258
    %v1045 = vunpack.c.l.b16 %v259
    %v1046 = vunpack.c.h.b16 %v259
    %v1047 = vunpack.c.l.b16 %v260
    %v1048 = vunpack.c.l.b16 %v261
    %v1049 = vunpack.c.h.b16 %v261
    %v1050 = vunpack.c.l.b16 %v262
    %v1051 = vunpack.c.h.b16 %v262
    %v1052 = vunpack.c.l.b16 %v263
    %v1053 = vunpack.c.h.b16 %v263
    %v1054 = vunpack.c.l.b16 %v264
    %v1055 = vunpack.c.l.b16 %v265
    %v1056 = vunpack.c.h.b16 %v265
    %v1057 = vunpack.c.l.b16 %v266
    %v1058 = vunpack.c.h.b16 %v266
    %v1059 = vunpack.c.l.b16 %v267
    %v1060 = vunpack.c.h.b16 %v267
    %v1061 = vunpack.c.l.b16 %v268
    %v1062 = vunpack.c.l.b16 %v269
    %v1063 = vunpack.c.h.b16 %v269
    %v1064 = vunpack.c.l.b16 %v270
    %v1065 = vunpack.c.h.b16 %v270
    %v1066 = vunpack.c.l.b16 %v271
    %v1067 = vunpack.c.h.b16 %v271
    %v1068 = vunpack.c.l.b16 %v272
    %v1069 = vunpack.c.l.b16 %v273
    %v1070 = vunpack.c.h.b16 %v273
    %v1071 = vunpack.c.l.b16 %v274
    %v1072 = vunpack.c.h.b16 %v274
    %v1073 = vunpack.c.l.b16 %v275
    %v1074 = vunpack.c.h.b16 %v275
    %v1075 = vunpack.c.l.b16 %v276
    %v1076 = vunpack.c.l.b16 %v277
    %v1077 = vunpack.c.h.b16 %v277
    %v1078 = vunpack.c.l.b16 %v278
    %v1079 = vunpack.c.h.b16 %v278
    %v1080 = vunpack.c.l.b16 %v279
    %v1081 = vunpack.c.h.b16 %v279
    %v1082 = vunpack.c.l.b16 %v280
    %v1083 = vunpack.c.l.b16 %v281
    %v1084 = vunpack.c.h.b16 %v281
    %v1085 = vunpack.c.l.b16 %v282
    %v1086 = vunpack.c.h.b16 %v282
    %v1087 = vunpack.c.l.b16 %v283
    %v1088 = vunpack.c.h.b16 %v283
    %v1089 = vunpack.c.l.b16 %v284
    %v1090 = vunpack.c.l.b16 %v285
    %v1091 = vunpack.c.h.b16 %v285
    %v1092 = vunpack.c.l.b16 %v286
    %v1093 = vunpack.c.h.b16 %v286
    %v1094 = vunpack.c.l.b16 %v287
    %v1095 = vunpack.c.h.b16 %v287
    %v1096 = vunpack.c.l.b16 %v288
    %v1097 = vunpack.c.l.b16 %v289
    %v1098 = vunpack.c.h.b16 %v289
    %v1099 = vunpack.c.l.b16 %v290
    %v1100 = vunpack.c.h.b16 %v290
    %v1101 = vunpack.c.l.b16 %v291
    %v1102 = vunpack.c.h.b16 %v291
    %v1103 = vunpack.c.l.b16 %v292
    %v1104 = vunpack.c.l.b16 %v293
    %v1105 = vunpack.c.h.b16 %v293
    %v1106 = vunpack.c.l.b16 %v294
    %v1107 = vunpack.c.h.b16 %v294
    %v1108 = vunpack.c.l.b16 %v295
    %v1109 = vunpack.c.h.b16 %v295
    %v1110 = vunpack.c.l.b16 %v296
    %v1111 = vunpack.c.l.b16 %v297
    %v1112 = vunpack.c.h.b16 %v297
    %v1113 = vunpack.c.l.b16 %v298
    %v1114 = vunpack.c.h.b16 %v298
    %v1115 = vunpack.c.l.b16 %v299
    %v1116 = vunpack.c.h.b16 %v299
    %v1117 = vunpack.c.l.b16 %v300
    %v1118 = vunpack.c.l.b16 %v301
    %v1119 = vunpack.c.h.b16 %v301
    %v1120 = vunpack.c.l.b16 %v302
    %v1121 = vunpack.c.h.b16 %v302
    %v1122 = vunpack.c.l.b16 %v303
    %v1123 = vunpack.c.h.b16 %v303
    %v1124 = vunpack.c.l.b16 %v304
    %v1125 = vunpack.c.l.b16 %v305
    %v1126 = vunpack.c.h.b16 %v305
    %v1127 = vunpack.c.l.b16 %v306
    %v1128 = vunpack.c.h.b16 %v306
    %v1129 = vunpack.c.l.b16 %v307
    %v1130 = vunpack.c.h.b16 %v307
    %v1131 = vunpack.c.l.b16 %v308
    %v1132 = vunpack.c.l.b16 %v309
    %v1133 = vunpack.c.h.b16 %v309
    %v1134 = vunpack.c.l.b16 %v310
    %v1135 = vunpack.c.h.b16 %v310
    %v1136 = vunpack.c.l.b16 %v311
    %v1137 = vunpack.c.h.b16 %v311
    %v1138 = vunpack.c.l.b16 %v312
    %v1139 = vunpack.c.l.b16 %v313
    %v1140 = vunpack.c.h.b16 %v313
    %v1141 = vunpack.c.l.b16 %v314
    %v1142 = vunpack.c.h.b16 %v314
    %v1143 = vunpack.c.l.b16 %v315
    %v1144 = vunpack.c.h.b16 %v315
    %v1145 = vunpack.c.l.b16 %v316
    %v1146 = vunpack.c.l.b16 %v317
    %v1147 = vunpack.c.h.b16 %v317
    %v1148 = vunpack.c.l.b16 %v318
    %v1149 = vunpack.c.h.b16 %v318
    %v1150 = vunpack.c.l.b16 %v319
    %v1151 = vunpack.c.h.b16 %v319
    %v1152 = vunpack.c.l.b16 %v320
    %v1153 = vunpack.c.l.b16 %v321
    %v1154 = vunpack.c.h.b16 %v321
    %v1155 = vunpack.c.l.b16 %v322
    %v1156 = vunpack.c.h.b16 %v322
    %v1157 = vunpack.c.l.b16 %v323
    %v1158 = vunpack.c.h.b16 %v323
    %v1159 = vunpack.c.l.b16 %v324
    %v1160 = vunpack.c.l.b16 %v325
    %v1161 = vunpack.c.h.b16 %v325
    %v1162 = vunpack.c.l.b16 %v326
    %v1163 = vunpack.c.h.b16 %v326
    %v1164 = vunpack.c.l.b16 %v327
    %v1165 = vunpack.c.h.b16 %v327
    %v1166 = vunpack.c.l.b16 %v328
    %v1167 = vunpack.c.l.b16 %v329
    %v1168 = vunpack.c.h.b16 %v329
    %v1169 = vunpack.c.l.b16 %v330
    %v1170 = vunpack.c.h.b16 %v330
    %v1171 = vunpack.c.l.b16 %v331
    %v1172 = vunpack.c.h.b16 %v331
    %v1173 = vunpack.c.l.b16 %v332
    %v1174 = vunpack.c.l.b16 %v333
    %v1175 = vunpack.c.h.b16 %v333
    %v1176 = vunpack.c.l.b16 %v334
    %v1177 = vunpack.c.h.b16 %v334
    %v1178 = vunpack.c.l.b16 %v335
    %v1179 = vunpack.c.h.b16 %v335
    %v1180 = vunpack.c.l.b16 %v336
    %v1181 = vunpack.c.l.b16 %v337
    %v1182 = vunpack.c.h.b16 %v337
    %v1183 = vunpack.c.l.b16 %v338
    %v1184 = vunpack.c.h.b16 %v338
    %v1185 = vunpack.c.l.b16 %v339
    %v1186 = vunpack.c.h.b16 %v339
    %v1187 = vunpack.c.l.b16 %v340
    %v1188 = vunpack.c.l.b16 %v341
    %v1189 = vunpack.c.h.b16 %v341
    %v1190 = vunpack.c.l.b16 %v342
    %v1191 = vunpack.c.h.b16 %v342
    %v1192 = vunpack.c.l.b16 %v343
    %v1193 = vunpack.c.h.b16 %v343
    %v1194 = vunpack.c.l.b16 %v344
    %v1195 = vunpack.c.l.b16 %v345
    %v1196 = vunpack.c.h.b16 %v345
    %v1197 = vunpack.c.l.b16 %v346
    %v1198 = vunpack.c.h.b16 %v346
    %v1199 = vunpack.c.l.b16 %v347
    %v1200 = vunpack.c.h.b16 %v347
    %v1201 = vunpack.c.l.b16 %v348
    %v1202 = vunpack.c.l.b16 %v349
    %v1203 = vunpack.c.h.b16 %v349
    %v1204 = vunpack.c.l.b16 %v350
    %v1205 = vunpack.c.h.b16 %v350
    %v1206 = vunpack.c.l.b16 %v351
    %v1207 = vunpack.c.h.b16 %v351
    %v1208 = vunpack.c.l.b16 %v352
    %v1209 = vunpack.c.l.b16 %v353
    %v1210 = vunpack.c.h.b16 %v353
    %v1211 = vunpack.c.l.b16 %v354
    %v1212 = vunpack.c.h.b16 %v354
    %v1213 = vunpack.c.l.b16 %v355
    %v1214 = vunpack.c.h.b16 %v355
    %v1215 = vunpack.c.l.b16 %v356
    %v1216 = vunpack.c.l.b16 %v357
    %v1217 = vunpack.c.h.b16 %v357
    %v1218 = vunpack.c.l.b16 %v358
    %v1219 = vunpack.c.h.b16 %v358
    %v1220 = vunpack.c.l.b16 %v359
    %v1221 = vunpack.c.h.b16 %v359
    %v1222 = vunpack.c.l.b16 %v360
    %v1223 = vunpack.c.l.b16 %v361
    %v1224 = vunpack.c.h.b16 %v361
    %v1225 = vunpack.c.l.b16 %v362
    %v1226 = vunpack.c.h.b16 %v362
    %v1227 = vunpack.c.l.b16 %v363
    %v1228 = vunpack.c.h.b16 %v363
    %v1229 = vunpack.c.l.b16 %v364
    %v1230 = vunpack.c.l.b16 %v365
    %v1231 = vunpack.c.h.b16 %v365
    %v1232 = vunpack.c.l.b16 %v366
    %v1233 = vunpack.c.h.b16 %v366
    %v1234 = vunpack.c.l.b16 %v367
    %v1235 = vunpack.c.h.b16 %v367
    %v1236 = vunpack.c.l.b16 %v368
    %v1237 = vunpack.c.l.b16 %v369
    %v1238 = vunpack.c.h.b16 %v369
    %v1239 = vunpack.c.l.b16 %v370
    %v1240 = vunpack.c.h.b16 %v370
    %v1241 = vunpack.c.l.b16 %v371
    %v1242 = vunpack.c.h.b16 %v371
    %v1243 = vunpack.c.l.b16 %v372
    %v1244 = vunpack.c.l.b16 %v373
    %v1245 = vunpack.c.h.b16 %v373
    %v1246 = vunpack.c.l.b16 %v374
    %v1247 = vunpack.c.h.b16 %v374
    %v1248 = vunpack.c.l.b16 %v375
    %v1249 = vunpack.c.h.b16 %v375
    %v1250 = vunpack.c.l.b16 %v376
    %v1251 = vunpack.c.l.b16 %v377
    %v1252 = vunpack.c.h.b16 %v377
    %v1253 = vunpack.c.l.b16 %v378
    %v1254 = vunpack.c.h.b16 %v378
    %v1255 = vunpack.c.l.b16 %v379
    %v1256 = vunpack.c.h.b16 %v379
    %v1257 = vunpack.c.l.b16 %v380
    %v1258 = vunpack.c.l.b16 %v381
    %v1259 = vunpack.c.h.b16 %v381
    %v1260 = vunpack.c.l.b16 %v382
    %v1261 = vunpack.c.h.b16 %v382
    %v1262 = vunpack.c.l.b16 %v383
    %v1263 = vunpack.c.h.b16 %v383
    %v1264 = vunpack.c.l.b16 %v384
    %v1265 = vunpack.c.l.b16 %v385
    %v1266 = vunpack.c.h.b16 %v385
    %v1267 = vunpack.c.l.b16 %v386
    %v1268 = vunpack.c.h.b16 %v386
    %v1269 = vunpack.c.l.b16 %v387
    %v1270 = vunpack.c.h.b16 %v387
    %v1271 = vunpack.c.l.b16 %v388
    %v1272 = vunpack.c.l.b16 %v389
    %v1273 = vunpack.c.h.b16 %v389
    %v1274 = vunpack.c.l.b16 %v390
    %v1275 = vunpack.c.h.b16 %v390
    %v1276 = vunpack.c.l.b16 %v391
    %v1277 = vunpack.c.h.b16 %v391
    %v1278 = vunpack.c.l.b16 %v392
    %v1279 = vunpack.c.l.b16 %v393
    %v1280 = vunpack.c.h.b16 %v393
    %v1281 = vunpack.c.l.b16 %v394
    %v1282 = vunpack.c.h.b16 %v394
    %v1283 = vunpack.c.l.b16 %v395
    %v1284 = vunpack.c.h.b16 %v395
    %v1285 = vunpack.c.l.b16 %v396
    %v1286 = vunpack.c.l.b16 %v397
    %v1287 = vunpack.c.h.b16 %v397
    %v1288 = vunpack.c.l.b16 %v398
    %v1289 = vunpack.c.h.b16 %v398
    %v1290 = vunpack.c.l.b16 %v399
    %v1291 = vunpack.c.h.b16 %v399
    %v1292 = vunpack.c.l.b16 %v400
    %v1293 = vunpack.c.l.b16 %v401
    %v1294 = vunpack.c.h.b16 %v401
    %v1295 = vunpack.c.l.b16 %v402
    %v1296 = vunpack.c.h.b16 %v402
    %v1297 = vunpack.c.l.b16 %v403
    %v1298 = vunpack.c.h.b16 %v403
    %v1299 = vunpack.c.l.b16 %v404
    %v1300 = vunpack.c.l.b16 %v405
    %v1301 = vunpack.c.h.b16 %v405
    %v1302 = vunpack.c.l.b16 %v406
    %v1303 = vunpack.c.h.b16 %v406
    %v1304 = vunpack.c.l.b16 %v407
    %v1305 = vunpack.c.h.b16 %v407
    %v1306 = vunpack.c.l.b16 %v408
    %v1307 = vunpack.c.l.b16 %v409
    %v1308 = vunpack.c.h.b16 %v409
    %v1309 = vunpack.c.l.b16 %v410
    %v1310 = vunpack.c.h.b16 %v410
    %v1311 = vunpack.c.l.b16 %v411
    %v1312 = vunpack.c.h.b16 %v411
    %v1313 = vunpack.c.l.b16 %v412
    %v1314 = vunpack.c.l.b16 %v413
    %v1315 = vunpack.c.h.b16 %v413
    %v1316 = vunpack.c.l.b16 %v414
    %v1317 = vunpack.c.h.b16 %v414
    %v1318 = vunpack.c.l.b16 %v415
    %v1319 = vunpack.c.h.b16 %v415
    %v1320 = vunpack.c.l.b16 %v416
    %v1321 = vunpack.c.l.b16 %v417
    %v1322 = vunpack.c.h.b16 %v417
    %v1323 = vunpack.c.l.b16 %v418
    %v1324 = vunpack.c.h.b16 %v418
    %v1325 = vunpack.c.l.b16 %v419
    %v1326 = vunpack.c.h.b16 %v419
    %v1327 = vunpack.c.l.b16 %v420
    %v1328 = vunpack.c.l.b16 %v421
    %v1329 = vunpack.c.h.b16 %v421
    %v1330 = vunpack.c.l.b16 %v422
    %v1331 = vunpack.c.h.b16 %v422
    %v1332 = vunpack.c.l.b16 %v423
    %v1333 = vunpack.c.h.b16 %v423
    %v1334 = vunpack.c.l.b16 %v424
    %v1335 = vunpack.c.l.b16 %v425
    %v1336 = vunpack.c.h.b16 %v425
    %v1337 = vunpack.c.l.b16 %v426
    %v1338 = vunpack.c.h.b16 %v426
    %v1339 = vunpack.c.l.b16 %v427
    %v1340 = vunpack.c.h.b16 %v427
    %v1341 = vunpack.c.l.b16 %v428
    %v1342 = vunpack.c.l.b16 %v429
    %v1343 = vunpack.c.h.b16 %v429
    %v1344 = vunpack.c.l.b16 %v430
    %v1345 = vunpack.c.h.b16 %v430
    %v1346 = vunpack.c.l.b16 %v431
    %v1347 = vunpack.c.h.b16 %v431
    %v1348 = vunpack.c.l.b16 %v432
    %v1349 = vunpack.c.l.b16 %v433
    %v1350 = vunpack.c.h.b16 %v433
    %v1351 = vunpack.c.l.b16 %v434
    %v1352 = vunpack.c.h.b16 %v434
    %v1353 = vunpack.c.l.b16 %v435
    %v1354 = vunpack.c.h.b16 %v435
    %v1355 = vunpack.c.l.b16 %v436
    %v1356 = vunpack.c.l.b16 %v437
    %v1357 = vunpack.c.h.b16 %v437
    %v1358 = vunpack.c.l.b16 %v438
    %v1359 = vunpack.c.h.b16 %v438
    %v1360 = vunpack.c.l.b16 %v439
    %v1361 = vunpack.c.h.b16 %v439
    %v1362 = vunpack.c.l.b16 %v440
    %v1363 = vunpack.c.l.b16 %v441
    %v1364 = vunpack.c.h.b16 %v441
    %v1365 = vunpack.c.l.b16 %v442
    %v1366 = vunpack.c.h.b16 %v442
    %v1367 = vunpack.c.l.b16 %v443
    %v1368 = vunpack.c.h.b16 %v443
    %v1369 = vunpack.c.l.b16 %v444
    %v1370 = vunpack.c.l.b16 %v445
    %v1371 = vunpack.c.h.b16 %v445
    %v1372 = vunpack.c.l.b16 %v446
    %v1373 = vunpack.c.h.b16 %v446
    %v1374 = vunpack.c.l.b16 %v447
    %v1375 = vunpack.c.h.b16 %v447
    %v1376 = vunpack.c.l.b16 %v448
    %v1377 = vunpack.c.l.b16 %v449
    %v1378 = vunpack.c.h.b16 %v449
    %v1379 = vunpack.c.l.b16 %v450
    %v1380 = vunpack.c.h.b16 %v450
    %v1381 = vunpack.c.l.b16 %v451
    %v1382 = vunpack.c.h.b16 %v451
    %v1383 = vunpack.c.l.b16 %v452
    %v1384 = vunpack.c.l.b16 %v453
    %v1385 = vunpack.c.h.b16 %v453
    %v1386 = vunpack.c.l.b16 %v454
    %v1387 = vunpack.c.h.b16 %v454
    %v1388 = vunpack.c.l.b16 %v455
    %v1389 = vunpack.c.h.b16 %v455
    %v1390 = vunpack.c.l.b16 %v456
    %v1391 = vunpack.c.l.b16 %v457
    %v1392 = vunpack.c.h.b16 %v457
    %v1393 = vunpack.c.l.b16 %v458
    %v1394 = vunpack.c.h.b16 %v458
    %v1395 = vunpack.c.l.b16 %v459
    %v1396 = vunpack.c.h.b16 %v459
    %v1397 = vunpack.c.l.b16 %v460
    %v1398 = vunpack.c.l.b16 %v461
    %v1399 = vunpack.c.h.b16 %v461
    %v1400 = vunpack.c.l.b16 %v462
    %v1401 = vunpack.c.h.b16 %v462
    %v1402 = vunpack.c.l.b16 %v463
    %v1403 = vunpack.c.h.b16 %v463
    %v1404 = vunpack.c.l.b16 %v464
    %v1405 = vunpack.c.l.b16 %v465
    %v1406 = vunpack.c.h.b16 %v465
    %v1407 = vunpack.c.l.b16 %v466
    %v1408 = vunpack.c.h.b16 %v466
    %v1409 = vunpack.c.l.b16 %v467
    %v1410 = vunpack.c.h.b16 %v467
    %v1411 = vunpack.c.l.b16 %v468
    %v1412 = vunpack.c.l.b16 %v469
    %v1413 = vunpack.c.h.b16 %v469
    %v1414 = vunpack.c.l.b16 %v470
    %v1415 = vunpack.c.h.b16 %v470
    %v1416 = vunpack.c.l.b16 %v471
    %v1417 = vunpack.c.h.b16 %v471
    %v1418 = vunpack.c.l.b16 %v472
    %v1419 = vunpack.c.l.b16 %v473
    %v1420 = vunpack.c.h.b16 %v473
    %v1421 = vunpack.c.l.b16 %v474
    %v1422 = vunpack.c.h.b16 %v474
    %v1423 = vunpack.c.l.b16 %v475
    %v1424 = vunpack.c.h.b16 %v475
    %v1425 = vunpack.c.l.b16 %v476
    %v1426 = vunpack.c.l.b16 %v477
    %v1427 = vunpack.c.h.b16 %v477
    %v1428 = vunpack.c.l.b16 %v478
    %v1429 = vunpack.c.h.b16 %v478
    %v1430 = vunpack.c.l.b16 %v479
    %v1431 = vunpack.c.h.b16 %v479
    %v1432 = vunpack.c.l.b16 %v480
    %v1433 = vunpack.c.l.b16 %v481
    %v1434 = vunpack.c.h.b16 %v481
    %v1435 = vunpack.c.l.b16 %v482
    %v1436 = vunpack.c.h.b16 %v482
    %v1437 = vunpack.c.l.b16 %v483
    %v1438 = vunpack.c.h.b16 %v483
    %v1439 = vunpack.c.l.b16 %v484
    %v1440 = vunpack.c.l.b16 %v485
    %v1441 = vunpack.c.h.b16 %v485
    %v1442 = vunpack.c.l.b16 %v486
    %v1443 = vunpack.c.h.b16 %v486
    %v1444 = vunpack.c.l.b16 %v487
    %v1445 = vunpack.c.h.b16 %v487
    %v1446 = vunpack.c.l.b16 %v488
    %v1447 = vunpack.c.l.b16 %v489
    %v1448 = vunpack.c.h.b16 %v489
    %v1449 = vunpack.c.l.b16 %v490
    %v1450 = vunpack.c.h.b16 %v490
    %v1451 = vunpack.c.l.b16 %v491
    %v1452 = vunpack.c.h.b16 %v491
    %v1453 = vunpack.c.l.b16 %v492
    %v1454 = vunpack.c.l.b16 %v493
    %v1455 = vunpack.c.h.b16 %v493
    %v1456 = vunpack.c.l.b16 %v494
    %v1457 = vunpack.c.h.b16 %v494
    %v1458 = vunpack.c.l.b16 %v495
    %v1459 = vunpack.c.h.b16 %v495
    %v1460 = vunpack.c.l.b16 %v496
    %v1461 = vunpack.c.l.b16 %v497
    %v1462 = vunpack.c.h.b16 %v497
    %v1463 = vunpack.c.l.b16 %v498
    %v1464 = vunpack.c.h.b16 %v498
    %v1465 = vunpack.c.l.b16 %v499
    %v1466 = vunpack.c.h.b16 %v499
    %v1467 = vunpack.c.l.b16 %v500
    %v1468 = vunpack.c.l.b16 %v501
    %v1469 = vunpack.c.h.b16 %v501
    %v1470 = vunpack.c.l.b16 %v502
    %v1471 = vunpack.c.h.b16 %v502
    %v1472 = vunpack.c.l.b16 %v503
    %v1473 = vunpack.c.h.b16 %v503
    %v1474 = vunpack.c.l.b16 %v504
    %v1475 = vunpack.c.l.b16 %v505
    %v1476 = vunpack.c.h.b16 %v505
    %v1477 = vunpack.c.l.b16 %v506
    %v1478 = vunpack.c.h.b16 %v506
    %v1479 = vunpack.c.l.b16 %v507
    %v1480 = vunpack.c.h.b16 %v507
    %v1481 = vunpack.c.l.b16 %v508
    %v1482 = vunpack.c.l.b16 %v509
    %v1483 = vunpack.c.h.b16 %v509
    %v1484 = vunpack.c.l.b16 %v510
    %v1485 = vunpack.c.h.b16 %v510
    %v1486 = vunpack.c.l.b16 %v511
    %v1487 = vunpack.c.h.b16 %v511
    %v1488 = vunpack.c.l.b16 %v512
    %v1489 = vunpack.c.l.b16 %v513
    %v1490 = vunpack.c.h.b16 %v513
    %v1491 = vunpack.c.l.b16 %v514
    %v1492 = vunpack.c.h.b16 %v514
    %v1493 = vunpack.c.l.b16 %v515
    %v1494 = vunpack.c.h.b16 %v515
    %v1495 = vunpack.c.l.b16 %v516
    %v1496 = vunpack.c.l.b16 %v517
    %v1497 = vunpack.c.h.b16 %v517
    %v1498 = vunpack.c.l.b16 %v518
    %v1499 = vunpack.c.h.b16 %v518
    %v1500 = vunpack.c.l.b16 %v519
    %v1501 = vunpack.c.h.b16 %v519
    %v1502 = vunpack.c.l.b16 %v520
    %v1503 = vunpack.c.l.b16 %v521
    %v1504 = vunpack.c.h.b16 %v521
    %v1505 = vunpack.c.l.b16 %v522
    %v1506 = vunpack.c.h.b16 %v522
    %v1507 = vunpack.c.l.b16 %v523
    %v1508 = vunpack.c.h.b16 %v523
    %v1509 = vunpack.c.l.b16 %v524
    %v1510 = vunpack.c.l.b16 %v525
    %v1511 = vunpack.c.h.b16 %v525
    %v1512 = vunpack.c.l.b16 %v526
    %v1513 = vunpack.c.h.b16 %v526
    %v1514 = vunpack.c.l.b16 %v527
    %v1515 = vunpack.c.h.b16 %v527
    %v1516 = vunpack.c.l.b16 %v528
    %v1517 = vunpack.c.l.b16 %v529
    %v1518 = vunpack.c.h.b16 %v529
    %v1519 = vunpack.c.l.b16 %v530
    %v1520 = vunpack.c.h.b16 %v530
    %v1521 = vunpack.c.l.b16 %v531
    %v1522 = vunpack.c.h.b16 %v531
    %v1523 = vunpack.c.l.b16 %v532
    %v1524 = vunpack.c.l.b16 %v533
    %v1525 = vunpack.c.h.b16 %v533
    %v1526 = vunpack.c.l.b16 %v534
    %v1527 = vunpack.c.h.b16 %v534
    %v1528 = vunpack.c.l.b16 %v535
    %v1529 = vunpack.c.h.b16 %v535
    %v1530 = vunpack.c.l.b16 %v536
    %v1531 = vunpack.c.l.b16 %v537
    %v1532 = vunpack.c.h.b16 %v537
    %v1533 = vunpack.c.l.b16 %v538
    %v1534 = vunpack.c.h.b16 %v538
    %v1535 = vunpack.c.l.b16 %v539
    %v1536 = vunpack.c.h.b16 %v539
    %v1537 = vunpack.c.l.b16 %v540
    %v1538 = vunpack.c.l.b16 %v541
    %v1539 = vunpack.c.h.b16 %v541
    %v1540 = vunpack.c.l.b16 %v542
    %v1541 = vunpack.c.h.b16 %v542
    %v1542 = vunpack.c.l.b16 %v543
    %v1543 = vunpack.c.h.b16 %v543
    %v1544 = vunpack.c.l.b16 %v544
    %v1545 = vunpack.c.l.b16 %v545
    %v1546 = vunpack.c.h.b16 %v545
    %v1547 = vunpack.c.l.b16 %v546
    %v1548 = vunpack.c.h.b16 %v546
    %v1549 = vunpack.c.l.b16 %v547
    %v1550 = vunpack.c.h.b16 %v547
    %v1551 = vunpack.c.l.b16 %v548
    %v1552 = vunpack.c.l.b16 %v549
    %v1553 = vunpack.c.h.b16 %v549
    %v1554 = vunpack.c.l.b16 %v550
    %v1555 = vunpack.c.h.b16 %v550
    %v1556 = vunpack.c.l.b16 %v551
    %v1557 = vunpack.c.h.b16 %v551
    %v1558 = vunpack.c.l.b16 %v552
    %v1559 = vunpack.c.l.b16 %v553
    %v1560 = vunpack.c.h.b16 %v553
    %v1561 = vunpack.c.l.b16 %v554
    %v1562 = vunpack.c.h.b16 %v554
    %v1563 = vunpack.c.l.b16 %v555
    %v1564 = vunpack.c.h.b16 %v555
    %v1565 = vunpack.c.l.b16 %v556
    %v1566 = vunpack.c.l.b16 %v557
    %v1567 = vunpack.c.h.b16 %v557
    %v1568 = vunpack.c.l.b16 %v558
    %v1569 = vunpack.c.h.b16 %v558
    %v1570 = vunpack.c.l.b16 %v559
    %v1571 = vunpack.c.h.b16 %v559
    %v1572 = vunpack.c.l.b16 %v560
    %v1573 = vunpack.c.l.b16 %v561
    %v1574 = vunpack.c.h.b16 %v561
    %v1575 = vunpack.c.l.b16 %v562
    %v1576 = vunpack.c.h.b16 %v562
    %v1577 = vunpack.c.l.b16 %v563
    %v1578 = vunpack.c.h.b16 %v563
    %v1579 = vunpack.c.l.b16 %v564
    %v1580 = vunpack.c.l.b16 %v565
    %v1581 = vunpack.c.h.b16 %v565
    %v1582 = vunpack.c.l.b16 %v566
    %v1583 = vunpack.c.h.b16 %v566
    %v1584 = vunpack.c.l.b16 %v567
    %v1585 = vunpack.c.h.b16 %v567
    %v1586 = vunpack.c.l.b16 %v568
    %v1587 = vunpack.c.l.b16 %v569
    %v1588 = vunpack.c.h.b16 %v569
    %v1589 = vunpack.c.l.b16 %v570
    %v1590 = vunpack.c.h.b16 %v570
    %v1591 = vunpack.c.l.b16 %v571
    %v1592 = vunpack.c.h.b16 %v571
    %v1593 = vunpack.c.l.b16 %v572
    %v1594 = vunpack.c.l.b16 %v573
    %v1595 = vunpack.c.h.b16 %v573
    %v1596 = vunpack.c.l.b16 %v574
    %v1597 = vunpack.c.h.b16 %v574
    %v1598 = vunpack.c.l.b16 %v575
    %v1599 = vunpack.c.h.b16 %v575
    %v1600 = vunpack.c.l.b16 %v576
    %v1601 = vunpack.c.l.b16 %v577
    %v1602 = vunpack.c.h.b16 %v577
    %v1603 = vunpack.c.l.b16 %v578
    %v1604 = vunpack.c.h.b16 %v578
    %v1605 = vunpack.c.l.b16 %v579
    %v1606 = vunpack.c.h.b16 %v579
    %v1607 = vunpack.c.l.b16 %v580
    %v1608 = vunpack.c.l.b16 %v581
    %v1609 = vunpack.c.h.b16 %v581
    %v1610 = vunpack.c.l.b16 %v582
    %v1611 = vunpack.c.h.b16 %v582
    %v1612 = vunpack.c.l.b16 %v583
    %v1613 = vunpack.c.h.b16 %v583
    %v1614 = vunpack.c.l.b16 %v584
    %v1615 = vunpack.c.l.b16 %v585
    %v1616 = vunpack.c.h.b16 %v585
    %v1617 = vunpack.c.l.b16 %v586
    %v1618 = vunpack.c.h.b16 %v586
    %v1619 = vunpack.c.l.b16 %v587
    %v1620 = vunpack.c.h.b16 %v587
    %v1621 = vunpack.c.l.b16 %v588
    %v1622 = vunpack.c.l.b16 %v589
    %v1623 = vunpack.c.h.b16 %v589
    %v1624 = vunpack.c.l.b16 %v590
    %v1625 = vunpack.c.h.b16 %v590
    %v1626 = vunpack.c.l.b16 %v591
    %v1627 = vunpack.c.h.b16 %v591
    %v1628 = vunpack.c.l.b16 %v592
    %v1629 = vunpack.c.l.b16 %v593
    %v1630 = vunpack.c.h.b16 %v593
    %v1631 = vunpack.c.l.b16 %v594
    %v1632 = vunpack.c.h.b16 %v594
    %v1633 = vunpack.c.l.b16 %v595
    %v1634 = vunpack.c.h.b16 %v595
    %v1635 = vunpack.c.l.b16 %v596
    %v1636 = vunpack.c.l.b16 %v597
    %v1637 = vunpack.c.h.b16 %v597
    %v1638 = vunpack.c.l.b16 %v598
    %v1639 = vunpack.c.h.b16 %v598
    %v1640 = vunpack.c.l.b16 %v599
    %v1641 = vunpack.c.h.b16 %v599
    %v1642 = vunpack.c.l.b16 %v600
    %v1643 = vunpack.c.l.b16 %v601
    %v1644 = vunpack.c.h.b16 %v601
    %v1645 = vunpack.c.l.b16 %v602
    %v1646 = vunpack.c.h.b16 %v602
    %v1647 = vunpack.c.l.b16 %v603
    %v1648 = vunpack.c.h.b16 %v603
    %v1649 = vunpack.c.l.b16 %v604
    %v1650 = vunpack.c.l.b16 %v605
    %v1651 = vunpack.c.h.b16 %v605
    %v1652 = vunpack.c.l.b16 %v606
    %v1653 = vunpack.c.h.b16 %v606
    %v1654 = vunpack.c.l.b16 %v607
    %v1655 = vunpack.c.h.b16 %v607
    %v1656 = vunpack.c.l.b16 %v608
    %v1657 = vunpack.c.l.b16 %v609
    %v1658 = vunpack.c.h.b16 %v609
    %v1659 = vunpack.c.l.b16 %v610
    %v1660 = vunpack.c.h.b16 %v610
    %v1661 = vunpack.c.l.b16 %v611
    %v1662 = vunpack.c.h.b16 %v611
    %v1663 = vunpack.c.l.b16 %v612
    %v1664 = vunpack.c.l.b16 %v613
    %v1665 = vunpack.c.h.b16 %v613
    %v1666 = vunpack.c.l.b16 %v614
    %v1667 = vunpack.c.h.b16 %v614
    %v1668 = vunpack.c.l.b16 %v615
    %v1669 = vunpack.c.h.b16 %v615
    %v1670 = vunpack.c.l.b16 %v616
    %v1671 = vunpack.c.l.b16 %v617
    %v1672 = vunpack.c.h.b16 %v617
    %v1673 = vunpack.c.l.b16 %v618
    %v1674 = vunpack.c.h.b16 %v618
    %v1675 = vunpack.c.l.b16 %v619
    %v1676 = vunpack.c.h.b16 %v619
    %v1677 = vunpack.c.l.b16 %v620
    %v1678 = vunpack.c.l.b16 %v621
    %v1679 = vunpack.c.h.b16 %v621
    %v1680 = vunpack.c.l.b16 %v622
    %v1681 = vunpack.c.h.b16 %v622
    %v1682 = vunpack.c.l.b16 %v623
    %v1683 = vunpack.c.h.b16 %v623
    %v1684 = vunpack.c.l.b16 %v624
    %v1685 = vunpack.c.l.b16 %v625
    %v1686 = vunpack.c.h.b16 %v625
    %v1687 = vunpack.c.l.b16 %v626
    %v1688 = vunpack.c.h.b16 %v626
    %v1689 = vunpack.c.l.b16 %v627
    %v1690 = vunpack.c.h.b16 %v627
    %v1691 = vunpack.c.l.b16 %v628
    %v1692 = vunpack.c.l.b16 %v629
    %v1693 = vunpack.c.h.b16 %v629
    %v1694 = vunpack.c.l.b16 %v630
    %v1695 = vunpack.c.h.b16 %v630
    %v1696 = vunpack.c.l.b16 %v631
    %v1697 = vunpack.c.h.b16 %v631
    %v1698 = vunpack.c.l.b16 %v632
    %v1699 = vunpack.c.l.b16 %v633
    %v1700 = vunpack.c.h.b16 %v633
    %v1701 = vunpack.c.l.b16 %v634
    %v1702 = vunpack.c.h.b16 %v634
    %v1703 = vunpack.c.l.b16 %v635
    %v1704 = vunpack.c.h.b16 %v635
    %v1705 = vunpack.c.l.b16 %v636
    %v1706 = vunpack.c.l.b16 %v637
    %v1707 = vunpack.c.h.b16 %v637
    %v1708 = vunpack.c.l.b16 %v638
    %v1709 = vunpack.c.h.b16 %v638
    %v1710 = vunpack.c.l.b16 %v639
    %v1711 = vunpack.c.h.b16 %v639
    %v1712 = vunpack.c.l.b16 %v640
    %v1713 = vunpack.c.l.b16 %v641
    %v1714 = vunpack.c.h.b16 %v641
    %v1715 = vunpack.c.l.b16 %v642
    %v1716 = vunpack.c.h.b16 %v642
    %v1717 = vunpack.c.l.b16 %v643
    %v1718 = vunpack.c.h.b16 %v643
    %v1719 = vunpack.c.l.b16 %v644
    %v1720 = vunpack.c.l.b16 %v645
    %v1721 = vunpack.c.h.b16 %v645
    %v1722 = vunpack.c.l.b16 %v646
    %v1723 = vunpack.c.h.b16 %v646
    %v1724 = vunpack.c.l.b16 %v647
    %v1725 = vunpack.c.h.b16 %v647
    %v1726 = vunpack.c.l.b16 %v648
    %v1727 = vpack.c.b16 %v1048, %v1041
    %v1728 = vpack.c.b16 %v1049, %v1042
    %v1729 = vpack.c.b16 %v1050, %v1043
    %v1730 = vpack.c.b16 %v1051, %v1044
    %v1731 = vpack.c.b16 %v1052, %v1045
    %v1732 = vpack.c.b16 %v1053, %v1046
    %v1733 = vpack.c.b16 %v1054, %v1047
    %v1734 = vpack.c.b16 %v1062, %v1055
    %v1735 = vpack.c.b16 %v1063, %v1056
    %v1736 = vpack.c.b16 %v1064, %v1057
    %v1737 = vpack.c.b16 %v1065, %v1058
    %v1738 = vpack.c.b16 %v1066, %v1059
    %v1739 = vpack.c.b16 %v1067, %v1060
    %v1740 = vpack.c.b16 %v1068, %v1061
    %v1741 = vpack.c.b16 %v1076, %v1069
    %v1742 = vpack.c.b16 %v1077, %v1070
    %v1743 = vpack.c.b16 %v1078, %v1071
    %v1744 = vpack.c.b16 %v1079, %v1072
    %v1745 = vpack.c.b16 %v1080, %v1073
    %v1746 = vpack.c.b16 %v1081, %v1074
    %v1747 = vpack.c.b16 %v1082, %v1075
    %v1748 = vpack.c.b16 %v1090, %v1083
    %v1749 = vpack.c.b16 %v1091, %v1084
    %v1750 = vpack.c.b16 %v1092, %v1085
    %v1751 = vpack.c.b16 %v1093, %v1086
    %v1752 = vpack.c.b16 %v1094, %v1087
    %v1753 = vpack.c.b16 %v1095, %v1088
    %v1754 = vpack.c.b16 %v1096, %v1089
    %v1755 = vpack.c.b16 %v1104, %v1097
    %v1756 = vpack.c.b16 %v1105, %v1098
    %v1757 = vpack.c.b16 %v1106, %v1099
    %v1758 = vpack.c.b16 %v1107, %v1100
    %v1759 = vpack.c.b16 %v1108, %v1101
    %v1760 = vpack.c.b16 %v1109, %v1102
    %v1761 = vpack.c.b16 %v1110, %v1103
    %v1762 = vpack.c.b16 %v1118, %v1111
    %v1763 = vpack.c.b16 %v1119, %v1112
    %v1764 = vpack.c.b16 %v1120, %v1113
    %v1765 = vpack.c.b16 %v1121, %v1114
    %v1766 = vpack.c.b16 %v1122, %v1115
    %v1767 = vpack.c.b16 %v1123, %v1116
    %v1768 = vpack.c.b16 %v1124, %v1117
    %v1769 = vpack.c.b16 %v1132, %v1125
    %v1770 = vpack.c.b16 %v1133, %v1126
    %v1771 = vpack.c.b16 %v1134, %v1127
    %v1772 = vpack.c.b16 %v1135, %v1128
    %v1773 = vpack.c.b16 %v1136, %v1129
    %v1774 = vpack.c.b16 %v1137, %v1130
    %v1775 = vpack.c.b16 %v1138, %v1131
    %v1776 = vpack.c.b16 %v1146, %v1139
    %v1777 = vpack.c.b16 %v1147, %v1140
    %v1778 = vpack.c.b16 %v1148, %v1141
    %v1779 = vpack.c.b16 %v1149, %v1142
    %v1780 = vpack.c.b16 %v1150, %v1143
    %v1781 = vpack.c.b16 %v1151, %v1144
    %v1782 = vpack.c.b16 %v1152, %v1145
    %v1783 = vpack.c.b16 %v1160, %v1153
    %v1784 = vpack.c.b16 %v1161, %v1154
    %v1785 = vpack.c.b16 %v1162, %v1155
    %v1786 = vpack.c.b16 %v1163, %v1156
    %v1787 = vpack.c.b16 %v1164, %v1157
    %v1788 = vpack.c.b16 %v1165, %v1158
    %v1789 = vpack.c.b16 %v1166, %v1159
    %v1790 = vpack.c.b16 %v1174, %v1167
    %v1791 = vpack.c.b16 %v1175, %v1168
    %v1792 = vpack.c.b16 %v1176, %v1169
    %v1793 = vpack.c.b16 %v1177, %v1170
    %v1794 = vpack.c.b16 %v1178, %v1171
    %v1795 = vpack.c.b16 %v1179, %v1172
    %v1796 = vpack.c.b16 %v1180, %v1173
    %v1797 = vpack.c.b16 %v1188, %v1181
    %v1798 = vpack.c.b16 %v1189, %v1182
    %v1799 = vpack.c.b16 %v1190, %v1183
    %v1800 = vpack.c.b16 %v1191, %v1184
    %v1801 = vpack.c.b16 %v1192, %v1185
    %v1802 = vpack.c.b16 %v1193, %v1186
    %v1803 = vpack.c.b16 %v1194, %v1187
    %v1804 = vpack.c.b16 %v1202, %v1195
    %v1805 = vpack.c.b16 %v1203, %v1196
    %v1806 = vpack.c.b16 %v1204, %v1197
    %v1807 = vpack.c.b16 %v1205, %v1198
    %v1808 = vpack.c.b16 %v1206, %v1199
    %v1809 = vpack.c.b16 %v1207, %v1200
    %v1810 = vpack.c.b16 %v1208, %v1201
    %v1811 = vpack.c.b16 %v1216, %v1209
    %v1812 = vpack.c.b16 %v1217, %v1210
    %v1813 = vpack.c.b16 %v1218, %v1211
    %v1814 = vpack.c.b16 %v1219, %v1212
    %v1815 = vpack.c.b16 %v1220, %v1213
    %v1816 = vpack.c.b16 %v1221, %v1214
    %v1817 = vpack.c.b16 %v1222, %v1215
    %v1818 = vpack.c.b16 %v1230, %v1223
    %v1819 = vpack.c.b16 %v1231, %v1224
    %v1820 = vpack.c.b16 %v1232, %v1225
    %v1821 = vpack.c.b16 %v1233, %v1226
    %v1822 = vpack.c.b16 %v1234, %v1227
    %v1823 = vpack.c.b16 %v1235, %v1228
    %v1824 = vpack.c.b16 %v1236, %v1229
    %v1825 = vpack.c.b16 %v1244, %v1237
    %v1826 = vpack.c.b16 %v1245, %v1238
    %v1827 = vpack.c.b16 %v1246, %v1239
    %v1828 = vpack.c.b16 %v1247, %v1240
    %v1829 = vpack.c.b16 %v1248, %v1241
    %v1830 = vpack.c.b16 %v1249, %v1242
    %v1831 = vpack.c.b16 %v1250, %v1243
    %v1832 = vpack.c.b16 %v1258, %v1251
    %v1833 = vpack.c.b16 %v1259, %v1252
    %v1834 = vpack.c.b16 %v1260, %v1253
    %v1835 = vpack.c.b16 %v1261, %v1254
    %v1836 = vpack.c.b16 %v1262, %v1255
    %v1837 = vpack.c.b16 %v1263, %v1256
    %v1838 = vpack.c.b16 %v1264, %v1257
    %v1839 = vpack.c.b16 %v1272, %v1265
    %v1840 = vpack.c.b16 %v1273, %v1266
    %v1841 = vpack.c.b16 %v1274, %v1267
    %v1842 = vpack.c.b16 %v1275, %v1268
    %v1843 = vpack.c.b16 %v1276, %v1269
    %v1844 = vpack.c.b16 %v1277, %v1270
    %v1845 = vpack.c.b16 %v1278, %v1271
    %v1846 = vpack.c.b16 %v1286, %v1279
    %v1847 = vpack.c.b16 %v1287, %v1280
    %v1848 = vpack.c.b16 %v1288, %v1281
    %v1849 = vpack.c.b16 %v1289, %v1282
    %v1850 = vpack.c.b16 %v1290, %v1283
    %v1851 = vpack.c.b16 %v1291, %v1284
    %v1852 = vpack.c.b16 %v1292, %v1285
    %v1853 = vpack.c.b16 %v1300, %v1293
    %v1854 = vpack.c.b16 %v1301, %v1294
    %v1855 = vpack.c.b16 %v1302, %v1295
    %v1856 = vpack.c.b16 %v1303, %v1296
    %v1857 = vpack.c.b16 %v1304, %v1297
    %v1858 = vpack.c.b16 %v1305, %v1298
    %v1859 = vpack.c.b16 %v1306, %v1299
    %v1860 = vpack.c.b16 %v1314, %v1307
    %v1861 = vpack.c.b16 %v1315, %v1308
    %v1862 = vpack.c.b16 %v1316, %v1309
    %v1863 = vpack.c.b16 %v1317, %v1310
    %v1864 = vpack.c.b16 %v1318, %v1311
    %v1865 = vpack.c.b16 %v1319, %v1312
    %v1866 = vpack.c.b16 %v1320, %v1313
    %v1867 = vpack.c.b16 %v1328, %v1321
    %v1868 = vpack.c.b16 %v1329, %v1322
    %v1869 = vpack.c.b16 %v1330, %v1323
    %v1870 = vpack.c.b16 %v1331, %v1324
    %v1871 = vpack.c.b16 %v1332, %v1325
    %v1872 = vpack.c.b16 %v1333, %v1326
    %v1873 = vpack.c.b16 %v1334, %v1327
    %v1874 = vpack.c.b16 %v1342, %v1335
    %v1875 = vpack.c.b16 %v1343, %v1336
    %v1876 = vpack.c.b16 %v1344, %v1337
    %v1877 = vpack.c.b16 %v1345, %v1338
    %v1878 = vpack.c.b16 %v1346, %v1339
    %v1879 = vpack.c.b16 %v1347, %v1340
    %v1880 = vpack.c.b16 %v1348, %v1341
    %v1881 = vpack.c.b16 %v1356, %v1349
    %v1882 = vpack.c.b16 %v1357, %v1350
    %v1883 = vpack.c.b16 %v1358, %v1351
    %v1884 = vpack.c.b16 %v1359, %v1352
    %v1885 = vpack.c.b16 %v1360, %v1353
    %v1886 = vpack.c.b16 %v1361, %v1354
    %v1887 = vpack.c.b16 %v1362, %v1355
    %v1888 = vpack.c.b16 %v1370, %v1363
    %v1889 = vpack.c.b16 %v1371, %v1364
    %v1890 = vpack.c.b16 %v1372, %v1365
    %v1891 = vpack.c.b16 %v1373, %v1366
    %v1892 = vpack.c.b16 %v1374, %v1367
    %v1893 = vpack.c.b16 %v1375, %v1368
    %v1894 = vpack.c.b16 %v1376, %v1369
    %v1895 = vpack.c.b16 %v1384, %v1377
    %v1896 = vpack.c.b16 %v1385, %v1378
    %v1897 = vpack.c.b16 %v1386, %v1379
    %v1898 = vpack.c.b16 %v1387, %v1380
    %v1899 = vpack.c.b16 %v1388, %v1381
    %v1900 = vpack.c.b16 %v1389, %v1382
    %v1901 = vpack.c.b16 %v1390, %v1383
    %v1902 = vpack.c.b16 %v1398, %v1391
    %v1903 = vpack.c.b16 %v1399, %v1392
    %v1904 = vpack.c.b16 %v1400, %v1393
    %v1905 = vpack.c.b16 %v1401, %v1394
    %v1906 = vpack.c.b16 %v1402, %v1395
    %v1907 = vpack.c.b16 %v1403, %v1396
    %v1908 = vpack.c.b16 %v1404, %v1397
    %v1909 = vpack.c.b16 %v1412, %v1405
    %v1910 = vpack.c.b16 %v1413, %v1406
    %v1911 = vpack.c.b16 %v1414, %v1407
    %v1912 = vpack.c.b16 %v1415, %v1408
    %v1913 = vpack.c.b16 %v1416, %v1409
    %v1914 = vpack.c.b16 %v1417, %v1410
    %v1915 = vpack.c.b16 %v1418, %v1411
    %v1916 = vpack.c.b16 %v1426, %v1419
    %v1917 = vpack.c.b16 %v1427, %v1420
    %v1918 = vpack.c.b16 %v1428, %v1421
    %v1919 = vpack.c.b16 %v1429, %v1422
    %v1920 = vpack.c.b16 %v1430, %v1423
    %v1921 = vpack.c.b16 %v1431, %v1424
    %v1922 = vpack.c.b16 %v1432, %v1425
    %v1923 = vpack.c.b16 %v1440, %v1433
    %v1924 = vpack.c.b16 %v1441, %v1434
    %v1925 = vpack.c.b16 %v1442, %v1435
    %v1926 = vpack.c.b16 %v1443, %v1436
    %v1927 = vpack.c.b16 %v1444, %v1437
    %v1928 = vpack.c.b16 %v1445, %v1438
    %v1929 = vpack.c.b16 %v1446, %v1439
    %v1930 = vpack.c.b16 %v1454, %v1447
    %v1931 = vpack.c.b16 %v1455, %v1448
    %v1932 = vpack.c.b16 %v1456, %v1449
    %v1933 = vpack.c.b16 %v1457, %v1450
    %v1934 = vpack.c.b16 %v1458, %v1451
    %v1935 = vpack.c.b16 %v1459, %v1452
    %v1936 = vpack.c.b16 %v1460, %v1453
    %v1937 = vpack.c.b16 %v1468, %v1461
    %v1938 = vpack.c.b16 %v1469, %v1462
    %v1939 = vpack.c.b16 %v1470, %v1463
    %v1940 = vpack.c.b16 %v1471, %v1464
    %v1941 = vpack.c.b16 %v1472, %v1465
    %v1942 = vpack.c.b16 %v1473, %v1466
    %v1943 = vpack.c.b16 %v1474, %v1467
    %v1944 = vpack.c.b16 %v1482, %v1475
    %v1945 = vpack.c.b16 %v1483, %v1476
    %v1946 = vpack.c.b16 %v1484, %v1477
    %v1947 = vpack.c.b16 %v1485, %v1478
    %v1948 = vpack.c.b16 %v1486, %v1479
    %v1949 = vpack.c.b16 %v1487, %v1480
    %v1950 = vpack.c.b16 %v1488, %v1481
    %v1951 = vpack.c.b16 %v1496, %v1489
    %v1952 = vpack.c.b16 %v1497, %v1490
    %v1953 = vpack.c.b16 %v1498, %v1491
    %v1954 = vpack.c.b16 %v1499, %v1492
    %v1955 = vpack.c.b16 %v1500, %v1493
    %v1956 = vpack.c.b16 %v1501, %v1494
    %v1957 = vpack.c.b16 %v1502, %v1495
    %v1958 = vpack.c.b16 %v1510, %v1503
    %v1959 = vpack.c.b16 %v1511, %v1504
    %v1960 = vpack.c.b16 %v1512, %v1505
    %v1961 = vpack.c.b16 %v1513, %v1506
    %v1962 = vpack.c.b16 %v1514, %v1507
    %v1963 = vpack.c.b16 %v1515, %v1508
    %v1964 = vpack.c.b16 %v1516, %v1509
    %v1965 = vpack.c.b16 %v1524, %v1517
    %v1966 = vpack.c.b16 %v1525, %v1518
    %v1967 = vpack.c.b16 %v1526, %v1519
    %v1968 = vpack.c.b16 %v1527, %v1520
    %v1969 = vpack.c.b16 %v1528, %v1521
    %v1970 = vpack.c.b16 %v1529, %v1522
    %v1971 = vpack.c.b16 %v1530, %v1523
    %v1972 = vpack.c.b16 %v1538, %v1531
    %v1973 = vpack.c.b16 %v1539, %v1532
    %v1974 = vpack.c.b16 %v1540, %v1533
    %v1975 = vpack.c.b16 %v1541, %v1534
    %v1976 = vpack.c.b16 %v1542, %v1535
    %v1977 = vpack.c.b16 %v1543, %v1536
    %v1978 = vpack.c.b16 %v1544, %v1537
    %v1979 = vpack.c.b16 %v1552, %v1545
    %v1980 = vpack.c.b16 %v1553, %v1546
    %v1981 = vpack.c.b16 %v1554, %v1547
    %v1982 = vpack.c.b16 %v1555, %v1548
    %v1983 = vpack.c.b16 %v1556, %v1549
    %v1984 = vpack.c.b16 %v1557, %v1550
    %v1985 = vpack.c.b16 %v1558, %v1551
    %v1986 = vpack.c.b16 %v1566, %v1559
    %v1987 = vpack.c.b16 %v1567, %v1560
    %v1988 = vpack.c.b16 %v1568, %v1561
    %v1989 = vpack.c.b16 %v1569, %v1562
    %v1990 = vpack.c.b16 %v1570, %v1563
    %v1991 = vpack.c.b16 %v1571, %v1564
    %v1992 = vpack.c.b16 %v1572, %v1565
    %v1993 = vpack.c.b16 %v1580, %v1573
    %v1994 = vpack.c.b16 %v1581, %v1574
    %v1995 = vpack.c.b16 %v1582, %v1575
    %v1996 = vpack.c.b16 %v1583, %v1576
    %v1997 = vpack.c.b16 %v1584, %v1577
    %v1998 = vpack.c.b16 %v1585, %v1578
    %v1999 = vpack.c.b16 %v1586, %v1579
    %v2000 = vpack.c.b16 %v1594, %v1587
    %v2001 = vpack.c.b16 %v1595, %v1588
    %v2002 = vpack.c.b16 %v1596, %v1589
    %v2003 = vpack.c.b16 %v1597, %v1590
    %v2004 = vpack.c.b16 %v1598, %v1591
    %v2005 = vpack.c.b16 %v1599, %v1592
    %v2006 = vpack.c.b16 %v1600, %v1593
    %v2007 = vpack.c.b16 %v1608, %v1601
    %v2008 = vpack.c.b16 %v1609, %v1602
    %v2009 = vpack.c.b16 %v1610, %v1603
    %v2010 = vpack.c.b16 %v1611, %v1604
    %v2011 = vpack.c.b16 %v1612, %v1605
    %v2012 = vpack.c.b16 %v1613, %v1606
    %v2013 = vpack.c.b16 %v1614, %v1607
    %v2014 = vpack.c.b16 %v1622, %v1615
    %v2015 = vpack.c.b16 %v1623, %v1616
    %v2016 = vpack.c.b16 %v1624, %v1617
    %v2017 = vpack.c.b16 %v1625, %v1618
    %v2018 = vpack.c.b16 %v1626, %v1619
    %v2019 = vpack.c.b16 %v1627, %v1620
    %v2020 = vpack.c.b16 %v1628, %v1621
    %v2021 = vpack.c.b16 %v1636, %v1629
    %v2022 = vpack.c.b16 %v1637, %v1630
    %v2023 = vpack.c.b16 %v1638, %v1631
    %v2024 = vpack.c.b16 %v1639, %v1632
    %v2025 = vpack.c.b16 %v1640, %v1633
    %v2026 = vpack.c.b16 %v1641, %v1634
    %v2027 = vpack.c.b16 %v1642, %v1635
    %v2028 = vpack.c.b16 %v1650, %v1643
    %v2029 = vpack.c.b16 %v1651, %v1644
    %v2030 = vpack.c.b16 %v1652, %v1645
    %v2031 = vpack.c.b16 %v1653, %v1646
    %v2032 = vpack.c.b16 %v1654, %v1647
    %v2033 = vpack.c.b16 %v1655, %v1648
    %v2034 = vpack.c.b16 %v1656, %v1649
    %v2035 = vpack.c.b16 %v1664, %v1657
    %v2036 = vpack.c.b16 %v1665, %v1658
    %v2037 = vpack.c.b16 %v1666, %v1659
    %v2038 = vpack.c.b16 %v1667, %v1660
    %v2039 = vpack.c.b16 %v1668, %v1661
    %v2040 = vpack.c.b16 %v1669, %v1662
    %v2041 = vpack.c.b16 %v1670, %v1663
    %v2042 = vpack.c.b16 %v1678, %v1671
    %v2043 = vpack.c.b16 %v1679, %v1672
    %v2044 = vpack.c.b16 %v1680, %v1673
    %v2045 = vpack.c.b16 %v1681, %v1674
    %v2046 = vpack.c.b16 %v1682, %v1675
    %v2047 = vpack.c.b16 %v1683, %v1676
    %v2048 = vpack.c.b16 %v1684, %v1677
    %v2049 = vpack.c.b16 %v1692, %v1685
    %v2050 = vpack.c.b16 %v1693, %v1686
    %v2051 = vpack.c.b16 %v1694, %v1687
    %v2052 = vpack.c.b16 %v1695, %v1688
    %v2053 = vpack.c.b16 %v1696, %v1689
    %v2054 = vpack.c.b16 %v1697, %v1690
    %v2055 = vpack.c.b16 %v1698, %v1691
    %v2056 = vpack.c.b16 %v1706, %v1699
    %v2057 = vpack.c.b16 %v1707, %v1700
    %v2058 = vpack.c.b16 %v1708, %v1701
    %v2059 = vpack.c.b16 %v1709, %v1702
    %v2060 = vpack.c.b16 %v1710, %v1703
    %v2061 = vpack.c.b16 %v1711, %v1704
    %v2062 = vpack.c.b16 %v1712, %v1705
    %v2063 = vpack.c.b16 %v1720, %v1713
    %v2064 = vpack.c.b16 %v1721, %v1714
    %v2065 = vpack.c.b16 %v1722, %v1715
    %v2066 = vpack.c.b16 %v1723, %v1716
    %v2067 = vpack.c.b16 %v1724, %v1717
    %v2068 = vpack.c.b16 %v1725, %v1718
    %v2069 = vpack.c.b16 %v1726, %v1719
    %v2414 = vsel %vm124, %v256, 0
    %2416 = vmatprep.subr.bf16.mxu0 %v1728
    %2417 = vmatpush1.bf16.msra.mxu0 %v1727
    %2418 = vmatprep.subr.bf16.mxu0 %v1735
    %2419 = vmatpush1.bf16.msra.mxu0 %v1734
    %2420 = vmatprep.subr.bf16.mxu0 %v1742
    %2421 = vmatpush1.bf16.msra.mxu0 %v1741
    %2422 = vmatprep.subr.bf16.mxu0 %v1749
    %2423 = vmatpush1.bf16.msra.mxu0 %v1748
    %2424 = vmatprep.subr.bf16.mxu0 %v1756
    %2425 = vmatpush1.bf16.msra.mxu0 %v1755
    %2426 = vmatprep.subr.bf16.mxu0 %v1763
    %2427 = vmatpush1.bf16.msra.mxu0 %v1762
    %2428 = vmatprep.subr.bf16.mxu0 %v1770
    %2429 = vmatpush1.bf16.msra.mxu0 %v1769
    %2430 = vmatprep.subr.bf16.mxu0 %v1777
    %2431 = vmatpush1.bf16.msra.mxu0 %v1776
    %2432 = vmatprep.subr.bf16.mxu0 %v1784
    %2433 = vmatpush1.bf16.msra.mxu0 %v1783
    %2434 = vmatprep.subr.bf16.mxu0 %v1791
    %2435 = vmatpush1.bf16.msra.mxu0 %v1790
    %2436 = vmatprep.subr.bf16.mxu0 %v1798
    %2437 = vmatpush1.bf16.msra.mxu0 %v1797
    %2438 = vmatprep.subr.bf16.mxu0 %v1805
    %2439 = vmatpush1.bf16.msra.mxu0 %v1804
    %2440 = vmatprep.subr.bf16.mxu0 %v1812
    %2441 = vmatpush1.bf16.msra.mxu0 %v1811
    %2442 = vmatprep.subr.bf16.mxu0 %v1819
    %2443 = vmatpush1.bf16.msra.mxu0 %v1818
    %2444 = vmatprep.subr.bf16.mxu0 %v1826
    %2445 = vmatpush1.bf16.msra.mxu0 %v1825
    %2446 = vmatprep.subr.bf16.mxu0 %v1833
    %2447 = vmatpush1.bf16.msra.mxu0 %v1832
    %2448 = vmatprep.mubr.bf16.mxu0 %v251
    %2449 = vmatmul.mubr.bf16.gmra.mrb[0].mxu0 %v250
    %v2450 = vpop.f32.mrb[0].mxu0
    %v2451 = vadd.f32 0.0, %v2450
    %v2452 = vpop.f32.mrb[0].mxu0
    %v2453 = vadd.f32 0.0, %v2452
    %v2454 = vpop.f32.mrb[0].mxu0
    %v2455 = vpop.f32.mrb[0].mxu0
    %2456 = vdwg.mxu0
    %2457 = vmatprep.subr.bf16.mxu0 %v1840
    %2458 = vmatpush1.bf16.msra.mxu0 %v1839
    %2459 = vmatprep.subr.bf16.mxu0 %v1847
    %2460 = vmatpush1.bf16.msra.mxu0 %v1846
    %2461 = vmatprep.subr.bf16.mxu0 %v1854
    %2462 = vmatpush1.bf16.msra.mxu0 %v1853
    %2463 = vmatprep.subr.bf16.mxu0 %v1861
    %2464 = vmatpush1.bf16.msra.mxu0 %v1860
    %2465 = vmatprep.subr.bf16.mxu0 %v1868
    %2466 = vmatpush1.bf16.msra.mxu0 %v1867
    %2467 = vmatprep.subr.bf16.mxu0 %v1875
    %2468 = vmatpush1.bf16.msra.mxu0 %v1874
    %2469 = vmatprep.subr.bf16.mxu0 %v1882
    %2470 = vmatpush1.bf16.msra.mxu0 %v1881
    %2471 = vmatprep.subr.bf16.mxu0 %v1889
    %2472 = vmatpush1.bf16.msra.mxu0 %v1888
    %2473 = vmatprep.subr.bf16.mxu0 %v1896
    %2474 = vmatpush1.bf16.msra.mxu0 %v1895
    %2475 = vmatprep.subr.bf16.mxu0 %v1903
    %2476 = vmatpush1.bf16.msra.mxu0 %v1902
    %2477 = vmatprep.subr.bf16.mxu0 %v1910
    %2478 = vmatpush1.bf16.msra.mxu0 %v1909
    %2479 = vmatprep.subr.bf16.mxu0 %v1917
    %2480 = vmatpush1.bf16.msra.mxu0 %v1916
    %2481 = vmatprep.subr.bf16.mxu0 %v1924
    %2482 = vmatpush1.bf16.msra.mxu0 %v1923
    %2483 = vmatprep.subr.bf16.mxu0 %v1931
    %2484 = vmatpush1.bf16.msra.mxu0 %v1930
    %2485 = vmatprep.subr.bf16.mxu0 %v1938
    %2486 = vmatpush1.bf16.msra.mxu0 %v1937
    %2487 = vmatprep.subr.bf16.mxu0 %v1945
    %2488 = vmatpush1.bf16.msra.mxu0 %v1944
    %2489 = vmatprep.mubr.bf16.mxu0 %v253
    %2490 = vmatmul.mubr.bf16.gmra.mrb[0].mxu0 %v252
    %v2491 = vpop.f32.mrb[0].mxu0
    %v2492 = vadd.f32 %v2451, %v2491
    %v2493 = vpop.f32.mrb[0].mxu0
    %v2494 = vadd.f32 %v2453, %v2493
    %v2495 = vpop.f32.mrb[0].mxu0
    %v2496 = vpop.f32.mrb[0].mxu0
    %2497 = vdwg.mxu0
    %2498 = vmatprep.subr.bf16.mxu0 %v1952
    %2499 = vmatpush1.bf16.msra.mxu0 %v1951
    %2500 = vmatprep.subr.bf16.mxu0 %v1959
    %2501 = vmatpush1.bf16.msra.mxu0 %v1958
    %2502 = vmatprep.subr.bf16.mxu0 %v1966
    %2503 = vmatpush1.bf16.msra.mxu0 %v1965
    %2504 = vmatprep.subr.bf16.mxu0 %v1973
    %2505 = vmatpush1.bf16.msra.mxu0 %v1972
    %2506 = vmatprep.subr.bf16.mxu0 %v1980
    %2507 = vmatpush1.bf16.msra.mxu0 %v1979
    %2508 = vmatprep.subr.bf16.mxu0 %v1987
    %2509 = vmatpush1.bf16.msra.mxu0 %v1986
    %2510 = vmatprep.subr.bf16.mxu0 %v1994
    %2511 = vmatpush1.bf16.msra.mxu0 %v1993
    %2512 = vmatprep.subr.bf16.mxu0 %v2001
    %2513 = vmatpush1.bf16.msra.mxu0 %v2000
    %2514 = vmatprep.subr.bf16.mxu0 %v2008
    %2515 = vmatpush1.bf16.msra.mxu0 %v2007
    %2516 = vmatprep.subr.bf16.mxu0 %v2015
    %2517 = vmatpush1.bf16.msra.mxu0 %v2014
    %2518 = vmatprep.subr.bf16.mxu0 %v2022
    %2519 = vmatpush1.bf16.msra.mxu0 %v2021
    %2520 = vmatprep.subr.bf16.mxu0 %v2029
    %2521 = vmatpush1.bf16.msra.mxu0 %v2028
    %2522 = vmatprep.subr.bf16.mxu0 %v2036
    %2523 = vmatpush1.bf16.msra.mxu0 %v2035
    %2524 = vmatprep.subr.bf16.mxu0 %v2043
    %2525 = vmatpush1.bf16.msra.mxu0 %v2042
    %2526 = vmatprep.subr.bf16.mxu0 %v2050
    %2527 = vmatpush1.bf16.msra.mxu0 %v2049
    %2528 = vmatprep.subr.bf16.mxu0 %v2057
    %2529 = vmatpush1.bf16.msra.mxu0 %v2056
    %2530 = vmatprep.mubr.bf16.mxu0 %v255
    %2531 = vmatmul.mubr.bf16.gmra.mrb[0].mxu0 %v254
    %v2532 = vpop.f32.mrb[0].mxu0
    %v2533 = vadd.f32 %v2492, %v2532
    %v2534 = vpop.f32.mrb[0].mxu0
    %v2535 = vadd.f32 %v2494, %v2534
    %v2536 = vpop.f32.mrb[0].mxu0
    %v2537 = vpop.f32.mrb[0].mxu0
    %2538 = vdwg.mxu0
    %2539 = vmatprep.subr.bf16.mxu0 %v2064
    %2540 = vmatpush1.bf16.msra.mxu0 %v2063
    %2541 = vmatprep.subr.bf16.mxu0 0
    %2542 = vmatpush1.bf16.msra.mxu0 0
    %2543 = vmatprep.subr.bf16.mxu0 0
    %2544 = vmatpush1.bf16.msra.mxu0 0
    %2545 = vmatprep.subr.bf16.mxu0 0
    %2546 = vmatpush1.bf16.msra.mxu0 0
    %2547 = vmatprep.subr.bf16.mxu0 0
    %2548 = vmatpush1.bf16.msra.mxu0 0
    %2549 = vmatprep.subr.bf16.mxu0 0
    %2550 = vmatpush1.bf16.msra.mxu0 0
    %2551 = vmatprep.subr.bf16.mxu0 0
    %2552 = vmatpush1.bf16.msra.mxu0 0
    %2553 = vmatprep.subr.bf16.mxu0 0
    %2554 = vmatpush1.bf16.msra.mxu0 0
    %2555 = vmatprep.subr.bf16.mxu0 0
    %2556 = vmatpush1.bf16.msra.mxu0 0
    %2557 = vmatprep.subr.bf16.mxu0 0
    %2558 = vmatpush1.bf16.msra.mxu0 0
    %2559 = vmatprep.subr.bf16.mxu0 0
    %2560 = vmatpush1.bf16.msra.mxu0 0
    %2561 = vmatprep.subr.bf16.mxu0 0
    %2562 = vmatpush1.bf16.msra.mxu0 0
    %2563 = vmatprep.subr.bf16.mxu0 0
    %2564 = vmatpush1.bf16.msra.mxu0 0
    %2565 = vmatprep.subr.bf16.mxu0 0
    %2566 = vmatpush1.bf16.msra.mxu0 0
    %2567 = vmatprep.subr.bf16.mxu0 0
    %2568 = vmatpush1.bf16.msra.mxu0 0
    %2569 = vmatprep.subr.bf16.mxu0 0
    %2570 = vmatpush1.bf16.msra.mxu0 0
    %2571 = vmatprep.mubr.bf16.mxu0 0
    %2572 = vmatmul.mubr.bf16.gmra.mrb[0].mxu0 %v2414
    %v2573 = vpop.f32.mrb[0].mxu0
    %v2574 = vadd.f32 %v2533, %v2573
    %v2575 = vpop.f32.mrb[0].mxu0
    %v2576 = vadd.f32 %v2535, %v2575
    %v2577 = vpop.f32.mrb[0].mxu0
    %v2578 = vpop.f32.mrb[0].mxu0
    %2579 = vdwg.mxu0
    %2580 = vmatprep.subr.bf16.mxu0 %v1730
    %2581 = vmatpush1.bf16.msra.mxu0 %v1729
    %2582 = vmatprep.subr.bf16.mxu0 %v1737
    %2583 = vmatpush1.bf16.msra.mxu0 %v1736
    %2584 = vmatprep.subr.bf16.mxu0 %v1744
    %2585 = vmatpush1.bf16.msra.mxu0 %v1743
    %2586 = vmatprep.subr.bf16.mxu0 %v1751
    %2587 = vmatpush1.bf16.msra.mxu0 %v1750
    %2588 = vmatprep.subr.bf16.mxu0 %v1758
    %2589 = vmatpush1.bf16.msra.mxu0 %v1757
    %2590 = vmatprep.subr.bf16.mxu0 %v1765
    %2591 = vmatpush1.bf16.msra.mxu0 %v1764
    %2592 = vmatprep.subr.bf16.mxu0 %v1772
    %2593 = vmatpush1.bf16.msra.mxu0 %v1771
    %2594 = vmatprep.subr.bf16.mxu0 %v1779
    %2595 = vmatpush1.bf16.msra.mxu0 %v1778
    %2596 = vmatprep.subr.bf16.mxu0 %v1786
    %2597 = vmatpush1.bf16.msra.mxu0 %v1785
    %2598 = vmatprep.subr.bf16.mxu0 %v1793
    %2599 = vmatpush1.bf16.msra.mxu0 %v1792
    %2600 = vmatprep.subr.bf16.mxu0 %v1800
    %2601 = vmatpush1.bf16.msra.mxu0 %v1799
    %2602 = vmatprep.subr.bf16.mxu0 %v1807
    %2603 = vmatpush1.bf16.msra.mxu0 %v1806
    %2604 = vmatprep.subr.bf16.mxu0 %v1814
    %2605 = vmatpush1.bf16.msra.mxu0 %v1813
    %2606 = vmatprep.subr.bf16.mxu0 %v1821
    %2607 = vmatpush1.bf16.msra.mxu0 %v1820
    %2608 = vmatprep.subr.bf16.mxu0 %v1828
    %2609 = vmatpush1.bf16.msra.mxu0 %v1827
    %2610 = vmatprep.subr.bf16.mxu0 %v1835
    %2611 = vmatpush1.bf16.msra.mxu0 %v1834
    %2612 = vmatprep.mubr.bf16.mxu0 %v251
    %2613 = vmatmul.mubr.bf16.gmra.mrb[0].mxu0 %v250
    %v2614 = vpop.f32.mrb[0].mxu0
    %v2615 = vadd.f32 0.0, %v2614
    %v2616 = vpop.f32.mrb[0].mxu0
    %v2617 = vadd.f32 0.0, %v2616
    %v2618 = vpop.f32.mrb[0].mxu0
    %v2619 = vpop.f32.mrb[0].mxu0
    %2620 = vdwg.mxu0
    %2621 = vmatprep.subr.bf16.mxu0 %v1842
    %2622 = vmatpush1.bf16.msra.mxu0 %v1841
    %2623 = vmatprep.subr.bf16.mxu0 %v1849
    %2624 = vmatpush1.bf16.msra.mxu0 %v1848
    %2625 = vmatprep.subr.bf16.mxu0 %v1856
    %2626 = vmatpush1.bf16.msra.mxu0 %v1855
    %2627 = vmatprep.subr.bf16.mxu0 %v1863
    %2628 = vmatpush1.bf16.msra.mxu0 %v1862
    %2629 = vmatprep.subr.bf16.mxu0 %v1870
    %2630 = vmatpush1.bf16.msra.mxu0 %v1869
    %2631 = vmatprep.subr.bf16.mxu0 %v1877
    %2632 = vmatpush1.bf16.msra.mxu0 %v1876
    %2633 = vmatprep.subr.bf16.mxu0 %v1884
    %2634 = vmatpush1.bf16.msra.mxu0 %v1883
    %2635 = vmatprep.subr.bf16.mxu0 %v1891
    %2636 = vmatpush1.bf16.msra.mxu0 %v1890
    %2637 = vmatprep.subr.bf16.mxu0 %v1898
    %2638 = vmatpush1.bf16.msra.mxu0 %v1897
    %2639 = vmatprep.subr.bf16.mxu0 %v1905
    %2640 = vmatpush1.bf16.msra.mxu0 %v1904
    %2641 = vmatprep.subr.bf16.mxu0 %v1912
    %2642 = vmatpush1.bf16.msra.mxu0 %v1911
    %2643 = vmatprep.subr.bf16.mxu0 %v1919
    %2644 = vmatpush1.bf16.msra.mxu0 %v1918
    %2645 = vmatprep.subr.bf16.mxu0 %v1926
    %2646 = vmatpush1.bf16.msra.mxu0 %v1925
    %2647 = vmatprep.subr.bf16.mxu0 %v1933
    %2648 = vmatpush1.bf16.msra.mxu0 %v1932
    %2649 = vmatprep.subr.bf16.mxu0 %v1940
    %2650 = vmatpush1.bf16.msra.mxu0 %v1939
    %2651 = vmatprep.subr.bf16.mxu0 %v1947
    %2652 = vmatpush1.bf16.msra.mxu0 %v1946
    %2653 = vmatprep.mubr.bf16.mxu0 %v253
    %2654 = vmatmul.mubr.bf16.gmra.mrb[0].mxu0 %v252
    %v2655 = vpop.f32.mrb[0].mxu0
    %v2656 = vadd.f32 %v2615, %v2655
    %v2657 = vpop.f32.mrb[0].mxu0
    %v2658 = vadd.f32 %v2617, %v2657
    %v2659 = vpop.f32.mrb[0].mxu0
    %v2660 = vpop.f32.mrb[0].mxu0
    %2661 = vdwg.mxu0
    %2662 = vmatprep.subr.bf16.mxu0 %v1954
    %2663 = vmatpush1.bf16.msra.mxu0 %v1953
    %2664 = vmatprep.subr.bf16.mxu0 %v1961
    %2665 = vmatpush1.bf16.msra.mxu0 %v1960
    %2666 = vmatprep.subr.bf16.mxu0 %v1968
    %2667 = vmatpush1.bf16.msra.mxu0 %v1967
    %2668 = vmatprep.subr.bf16.mxu0 %v1975
    %2669 = vmatpush1.bf16.msra.mxu0 %v1974
    %2670 = vmatprep.subr.bf16.mxu0 %v1982
    %2671 = vmatpush1.bf16.msra.mxu0 %v1981
    %2672 = vmatprep.subr.bf16.mxu0 %v1989
    %2673 = vmatpush1.bf16.msra.mxu0 %v1988
    %2674 = vmatprep.subr.bf16.mxu0 %v1996
    %2675 = vmatpush1.bf16.msra.mxu0 %v1995
    %2676 = vmatprep.subr.bf16.mxu0 %v2003
    %2677 = vmatpush1.bf16.msra.mxu0 %v2002
    %2678 = vmatprep.subr.bf16.mxu0 %v2010
    %2679 = vmatpush1.bf16.msra.mxu0 %v2009
    %2680 = vmatprep.subr.bf16.mxu0 %v2017
    %2681 = vmatpush1.bf16.msra.mxu0 %v2016
    %2682 = vmatprep.subr.bf16.mxu0 %v2024
    %2683 = vmatpush1.bf16.msra.mxu0 %v2023
    %2684 = vmatprep.subr.bf16.mxu0 %v2031
    %2685 = vmatpush1.bf16.msra.mxu0 %v2030
    %2686 = vmatprep.subr.bf16.mxu0 %v2038
    %2687 = vmatpush1.bf16.msra.mxu0 %v2037
    %2688 = vmatprep.subr.bf16.mxu0 %v2045
    %2689 = vmatpush1.bf16.msra.mxu0 %v2044
    %2690 = vmatprep.subr.bf16.mxu0 %v2052
    %2691 = vmatpush1.bf16.msra.mxu0 %v2051
    %2692 = vmatprep.subr.bf16.mxu0 %v2059
    %2693 = vmatpush1.bf16.msra.mxu0 %v2058
    %2694 = vmatprep.mubr.bf16.mxu0 %v255
    %2695 = vmatmul.mubr.bf16.gmra.mrb[0].mxu0 %v254
    %v2696 = vpop.f32.mrb[0].mxu0
    %v2697 = vadd.f32 %v2656, %v2696
    %v2698 = vpop.f32.mrb[0].mxu0
    %v2699 = vadd.f32 %v2658, %v2698
    %v2700 = vpop.f32.mrb[0].mxu0
    %v2701 = vpop.f32.mrb[0].mxu0
    %2702 = vdwg.mxu0
    %2703 = vmatprep.subr.bf16.mxu0 %v2066
    %2704 = vmatpush1.bf16.msra.mxu0 %v2065
    %2705 = vmatprep.subr.bf16.mxu0 0
    %2706 = vmatpush1.bf16.msra.mxu0 0
    %2707 = vmatprep.subr.bf16.mxu0 0
    %2708 = vmatpush1.bf16.msra.mxu0 0
    %2709 = vmatprep.subr.bf16.mxu0 0
    %2710 = vmatpush1.bf16.msra.mxu0 0
    %2711 = vmatprep.subr.bf16.mxu0 0
    %2712 = vmatpush1.bf16.msra.mxu0 0
    %2713 = vmatprep.subr.bf16.mxu0 0
    %2714 = vmatpush1.bf16.msra.mxu0 0
    %2715 = vmatprep.subr.bf16.mxu0 0
    %2716 = vmatpush1.bf16.msra.mxu0 0
    %2717 = vmatprep.subr.bf16.mxu0 0
    %2718 = vmatpush1.bf16.msra.mxu0 0
    %2719 = vmatprep.subr.bf16.mxu0 0
    %2720 = vmatpush1.bf16.msra.mxu0 0
    %2721 = vmatprep.subr.bf16.mxu0 0
    %2722 = vmatpush1.bf16.msra.mxu0 0
    %2723 = vmatprep.subr.bf16.mxu0 0
    %2724 = vmatpush1.bf16.msra.mxu0 0
    %2725 = vmatprep.subr.bf16.mxu0 0
    %2726 = vmatpush1.bf16.msra.mxu0 0
    %2727 = vmatprep.subr.bf16.mxu0 0
    %2728 = vmatpush1.bf16.msra.mxu0 0
    %2729 = vmatprep.subr.bf16.mxu0 0
    %2730 = vmatpush1.bf16.msra.mxu0 0
    %2731 = vmatprep.subr.bf16.mxu0 0
    %2732 = vmatpush1.bf16.msra.mxu0 0
    %2733 = vmatprep.subr.bf16.mxu0 0
    %2734 = vmatpush1.bf16.msra.mxu0 0
    %2735 = vmatprep.mubr.bf16.mxu0 0
    %2736 = vmatmul.mubr.bf16.gmra.mrb[0].mxu0 %v2414
    %v2737 = vpop.f32.mrb[0].mxu0
    %v2738 = vadd.f32 %v2697, %v2737
    %v2739 = vpop.f32.mrb[0].mxu0
    %v2740 = vadd.f32 %v2699, %v2739
    %v2741 = vpop.f32.mrb[0].mxu0
    %v2742 = vpop.f32.mrb[0].mxu0
    %2743 = vdwg.mxu0
    %2744 = vmatprep.subr.bf16.mxu0 %v1732
    %2745 = vmatpush1.bf16.msra.mxu0 %v1731
    %2746 = vmatprep.subr.bf16.mxu0 %v1739
    %2747 = vmatpush1.bf16.msra.mxu0 %v1738
    %2748 = vmatprep.subr.bf16.mxu0 %v1746
    %2749 = vmatpush1.bf16.msra.mxu0 %v1745
    %2750 = vmatprep.subr.bf16.mxu0 %v1753
    %2751 = vmatpush1.bf16.msra.mxu0 %v1752
    %2752 = vmatprep.subr.bf16.mxu0 %v1760
    %2753 = vmatpush1.bf16.msra.mxu0 %v1759
    %2754 = vmatprep.subr.bf16.mxu0 %v1767
    %2755 = vmatpush1.bf16.msra.mxu0 %v1766
    %2756 = vmatprep.subr.bf16.mxu0 %v1774
    %2757 = vmatpush1.bf16.msra.mxu0 %v1773
    %2758 = vmatprep.subr.bf16.mxu0 %v1781
    %2759 = vmatpush1.bf16.msra.mxu0 %v1780
    %2760 = vmatprep.subr.bf16.mxu0 %v1788
    %2761 = vmatpush1.bf16.msra.mxu0 %v1787
    %2762 = vmatprep.subr.bf16.mxu0 %v1795
    %2763 = vmatpush1.bf16.msra.mxu0 %v1794
    %2764 = vmatprep.subr.bf16.mxu0 %v1802
    %2765 = vmatpush1.bf16.msra.mxu0 %v1801
    %2766 = vmatprep.subr.bf16.mxu0 %v1809
    %2767 = vmatpush1.bf16.msra.mxu0 %v1808
    %2768 = vmatprep.subr.bf16.mxu0 %v1816
    %2769 = vmatpush1.bf16.msra.mxu0 %v1815
    %2770 = vmatprep.subr.bf16.mxu0 %v1823
    %2771 = vmatpush1.bf16.msra.mxu0 %v1822
    %2772 = vmatprep.subr.bf16.mxu0 %v1830
    %2773 = vmatpush1.bf16.msra.mxu0 %v1829
    %2774 = vmatprep.subr.bf16.mxu0 %v1837
    %2775 = vmatpush1.bf16.msra.mxu0 %v1836
    %2776 = vmatprep.mubr.bf16.mxu0 %v251
    %2777 = vmatmul.mubr.bf16.gmra.mrb[0].mxu0 %v250
    %v2778 = vpop.f32.mrb[0].mxu0
    %v2779 = vadd.f32 0.0, %v2778
    %v2780 = vpop.f32.mrb[0].mxu0
    %v2781 = vadd.f32 0.0, %v2780
    %v2782 = vpop.f32.mrb[0].mxu0
    %v2783 = vpop.f32.mrb[0].mxu0
    %2784 = vdwg.mxu0
    %2785 = vmatprep.subr.bf16.mxu0 %v1844
    %2786 = vmatpush1.bf16.msra.mxu0 %v1843
    %2787 = vmatprep.subr.bf16.mxu0 %v1851
    %2788 = vmatpush1.bf16.msra.mxu0 %v1850
    %2789 = vmatprep.subr.bf16.mxu0 %v1858
    %2790 = vmatpush1.bf16.msra.mxu0 %v1857
    %2791 = vmatprep.subr.bf16.mxu0 %v1865
    %2792 = vmatpush1.bf16.msra.mxu0 %v1864
    %2793 = vmatprep.subr.bf16.mxu0 %v1872
    %2794 = vmatpush1.bf16.msra.mxu0 %v1871
    %2795 = vmatprep.subr.bf16.mxu0 %v1879
    %2796 = vmatpush1.bf16.msra.mxu0 %v1878
    %2797 = vmatprep.subr.bf16.mxu0 %v1886
    %2798 = vmatpush1.bf16.msra.mxu0 %v1885
    %2799 = vmatprep.subr.bf16.mxu0 %v1893
    %2800 = vmatpush1.bf16.msra.mxu0 %v1892
    %2801 = vmatprep.subr.bf16.mxu0 %v1900
    %2802 = vmatpush1.bf16.msra.mxu0 %v1899
    %2803 = vmatprep.subr.bf16.mxu0 %v1907
    %2804 = vmatpush1.bf16.msra.mxu0 %v1906
    %2805 = vmatprep.subr.bf16.mxu0 %v1914
    %2806 = vmatpush1.bf16.msra.mxu0 %v1913
    %2807 = vmatprep.subr.bf16.mxu0 %v1921
    %2808 = vmatpush1.bf16.msra.mxu0 %v1920
    %2809 = vmatprep.subr.bf16.mxu0 %v1928
    %2810 = vmatpush1.bf16.msra.mxu0 %v1927
    %2811 = vmatprep.subr.bf16.mxu0 %v1935
    %2812 = vmatpush1.bf16.msra.mxu0 %v1934
    %2813 = vmatprep.subr.bf16.mxu0 %v1942
    %2814 = vmatpush1.bf16.msra.mxu0 %v1941
    %2815 = vmatprep.subr.bf16.mxu0 %v1949
    %2816 = vmatpush1.bf16.msra.mxu0 %v1948
    %2817 = vmatprep.mubr.bf16.mxu0 %v253
    %2818 = vmatmul.mubr.bf16.gmra.mrb[0].mxu0 %v252
    %v2819 = vpop.f32.mrb[0].mxu0
    %v2820 = vadd.f32 %v2779, %v2819
    %v2821 = vpop.f32.mrb[0].mxu0
    %v2822 = vadd.f32 %v2781, %v2821
    %v2823 = vpop.f32.mrb[0].mxu0
    %v2824 = vpop.f32.mrb[0].mxu0
    %2825 = vdwg.mxu0
    %2826 = vmatprep.subr.bf16.mxu0 %v1956
    %2827 = vmatpush1.bf16.msra.mxu0 %v1955
    %2828 = vmatprep.subr.bf16.mxu0 %v1963
    %2829 = vmatpush1.bf16.msra.mxu0 %v1962
    %2830 = vmatprep.subr.bf16.mxu0 %v1970
    %2831 = vmatpush1.bf16.msra.mxu0 %v1969
    %2832 = vmatprep.subr.bf16.mxu0 %v1977
    %2833 = vmatpush1.bf16.msra.mxu0 %v1976
    %2834 = vmatprep.subr.bf16.mxu0 %v1984
    %2835 = vmatpush1.bf16.msra.mxu0 %v1983
    %2836 = vmatprep.subr.bf16.mxu0 %v1991
    %2837 = vmatpush1.bf16.msra.mxu0 %v1990
    %2838 = vmatprep.subr.bf16.mxu0 %v1998
    %2839 = vmatpush1.bf16.msra.mxu0 %v1997
    %2840 = vmatprep.subr.bf16.mxu0 %v2005
    %2841 = vmatpush1.bf16.msra.mxu0 %v2004
    %2842 = vmatprep.subr.bf16.mxu0 %v2012
    %2843 = vmatpush1.bf16.msra.mxu0 %v2011
    %2844 = vmatprep.subr.bf16.mxu0 %v2019
    %2845 = vmatpush1.bf16.msra.mxu0 %v2018
    %2846 = vmatprep.subr.bf16.mxu0 %v2026
    %2847 = vmatpush1.bf16.msra.mxu0 %v2025
    %2848 = vmatprep.subr.bf16.mxu0 %v2033
    %2849 = vmatpush1.bf16.msra.mxu0 %v2032
    %2850 = vmatprep.subr.bf16.mxu0 %v2040
    %2851 = vmatpush1.bf16.msra.mxu0 %v2039
    %2852 = vmatprep.subr.bf16.mxu0 %v2047
    %2853 = vmatpush1.bf16.msra.mxu0 %v2046
    %2854 = vmatprep.subr.bf16.mxu0 %v2054
    %2855 = vmatpush1.bf16.msra.mxu0 %v2053
    %2856 = vmatprep.subr.bf16.mxu0 %v2061
    %2857 = vmatpush1.bf16.msra.mxu0 %v2060
    %2858 = vmatprep.mubr.bf16.mxu0 %v255
    %2859 = vmatmul.mubr.bf16.gmra.mrb[0].mxu0 %v254
    %v2860 = vpop.f32.mrb[0].mxu0
    %v2861 = vadd.f32 %v2820, %v2860
    %v2862 = vpop.f32.mrb[0].mxu0
    %v2863 = vadd.f32 %v2822, %v2862
    %v2864 = vpop.f32.mrb[0].mxu0
    %v2865 = vpop.f32.mrb[0].mxu0
    %2866 = vdwg.mxu0
    %2867 = vmatprep.subr.bf16.mxu0 %v2068
    %2868 = vmatpush1.bf16.msra.mxu0 %v2067
    %2869 = vmatprep.subr.bf16.mxu0 0
    %2870 = vmatpush1.bf16.msra.mxu0 0
    %2871 = vmatprep.subr.bf16.mxu0 0
    %2872 = vmatpush1.bf16.msra.mxu0 0
    %2873 = vmatprep.subr.bf16.mxu0 0
    %2874 = vmatpush1.bf16.msra.mxu0 0
    %2875 = vmatprep.subr.bf16.mxu0 0
    %2876 = vmatpush1.bf16.msra.mxu0 0
    %2877 = vmatprep.subr.bf16.mxu0 0
    %2878 = vmatpush1.bf16.msra.mxu0 0
    %2879 = vmatprep.subr.bf16.mxu0 0
    %2880 = vmatpush1.bf16.msra.mxu0 0
    %2881 = vmatprep.subr.bf16.mxu0 0
    %2882 = vmatpush1.bf16.msra.mxu0 0
    %2883 = vmatprep.subr.bf16.mxu0 0
    %2884 = vmatpush1.bf16.msra.mxu0 0
    %2885 = vmatprep.subr.bf16.mxu0 0
    %2886 = vmatpush1.bf16.msra.mxu0 0
    %2887 = vmatprep.subr.bf16.mxu0 0
    %2888 = vmatpush1.bf16.msra.mxu0 0
    %2889 = vmatprep.subr.bf16.mxu0 0
    %2890 = vmatpush1.bf16.msra.mxu0 0
    %2891 = vmatprep.subr.bf16.mxu0 0
    %2892 = vmatpush1.bf16.msra.mxu0 0
    %2893 = vmatprep.subr.bf16.mxu0 0
    %2894 = vmatpush1.bf16.msra.mxu0 0
    %2895 = vmatprep.subr.bf16.mxu0 0
    %2896 = vmatpush1.bf16.msra.mxu0 0
    %2897 = vmatprep.subr.bf16.mxu0 0
    %2898 = vmatpush1.bf16.msra.mxu0 0
    %2899 = vmatprep.mubr.bf16.mxu0 0
    %2900 = vmatmul.mubr.bf16.gmra.mrb[0].mxu0 %v2414
    %v2901 = vpop.f32.mrb[0].mxu0
    %v2902 = vadd.f32 %v2861, %v2901
    %v2903 = vpop.f32.mrb[0].mxu0
    %v2904 = vadd.f32 %v2863, %v2903
    %v2905 = vpop.f32.mrb[0].mxu0
    %v2906 = vpop.f32.mrb[0].mxu0
    %2907 = vdwg.mxu0
    %2908 = vmatprep.subr.bf16.mxu0 0
    %2909 = vmatpush1.bf16.msra.mxu0 %v1733
    %2910 = vmatprep.subr.bf16.mxu0 0
    %2911 = vmatpush1.bf16.msra.mxu0 %v1740
    %2912 = vmatprep.subr.bf16.mxu0 0
    %2913 = vmatpush1.bf16.msra.mxu0 %v1747
    %2914 = vmatprep.subr.bf16.mxu0 0
    %2915 = vmatpush1.bf16.msra.mxu0 %v1754
    %2916 = vmatprep.subr.bf16.mxu0 0
    %2917 = vmatpush1.bf16.msra.mxu0 %v1761
    %2918 = vmatprep.subr.bf16.mxu0 0
    %2919 = vmatpush1.bf16.msra.mxu0 %v1768
    %2920 = vmatprep.subr.bf16.mxu0 0
    %2921 = vmatpush1.bf16.msra.mxu0 %v1775
    %2922 = vmatprep.subr.bf16.mxu0 0
    %2923 = vmatpush1.bf16.msra.mxu0 %v1782
    %2924 = vmatprep.subr.bf16.mxu0 0
    %2925 = vmatpush1.bf16.msra.mxu0 %v1789
    %2926 = vmatprep.subr.bf16.mxu0 0
    %2927 = vmatpush1.bf16.msra.mxu0 %v1796
    %2928 = vmatprep.subr.bf16.mxu0 0
    %2929 = vmatpush1.bf16.msra.mxu0 %v1803
    %2930 = vmatprep.subr.bf16.mxu0 0
    %2931 = vmatpush1.bf16.msra.mxu0 %v1810
    %2932 = vmatprep.subr.bf16.mxu0 0
    %2933 = vmatpush1.bf16.msra.mxu0 %v1817
    %2934 = vmatprep.subr.bf16.mxu0 0
    %2935 = vmatpush1.bf16.msra.mxu0 %v1824
    %2936 = vmatprep.subr.bf16.mxu0 0
    %2937 = vmatpush1.bf16.msra.mxu0 %v1831
    %2938 = vmatprep.subr.bf16.mxu0 0
    %2939 = vmatpush1.bf16.msra.mxu0 %v1838
    %2940 = vmatprep.mubr.bf16.mxu0 %v251
    %2941 = vmatmul.mubr.bf16.gmra.mrb[0].mxu0 %v250
    %v2942 = vpop.f32.mrb[0].mxu0
    %v2943 = vadd.f32 0.0, %v2942
    %v2944 = vpop.f32.mrb[0].mxu0
    %v2945 = vpop.f32.mrb[0].mxu0
    %v2946 = vpop.f32.mrb[0].mxu0
    %2947 = vdwg.mxu0
    %2948 = vmatprep.subr.bf16.mxu0 0
    %2949 = vmatpush1.bf16.msra.mxu0 %v1845
    %2950 = vmatprep.subr.bf16.mxu0 0
    %2951 = vmatpush1.bf16.msra.mxu0 %v1852
    %2952 = vmatprep.subr.bf16.mxu0 0
    %2953 = vmatpush1.bf16.msra.mxu0 %v1859
    %2954 = vmatprep.subr.bf16.mxu0 0
    %2955 = vmatpush1.bf16.msra.mxu0 %v1866
    %2956 = vmatprep.subr.bf16.mxu0 0
    %2957 = vmatpush1.bf16.msra.mxu0 %v1873
    %2958 = vmatprep.subr.bf16.mxu0 0
    %2959 = vmatpush1.bf16.msra.mxu0 %v1880
    %2960 = vmatprep.subr.bf16.mxu0 0
    %2961 = vmatpush1.bf16.msra.mxu0 %v1887
    %2962 = vmatprep.subr.bf16.mxu0 0
    %2963 = vmatpush1.bf16.msra.mxu0 %v1894
    %2964 = vmatprep.subr.bf16.mxu0 0
    %2965 = vmatpush1.bf16.msra.mxu0 %v1901
    %2966 = vmatprep.subr.bf16.mxu0 0
    %2967 = vmatpush1.bf16.msra.mxu0 %v1908
    %2968 = vmatprep.subr.bf16.mxu0 0
    %2969 = vmatpush1.bf16.msra.mxu0 %v1915
    %2970 = vmatprep.subr.bf16.mxu0 0
    %2971 = vmatpush1.bf16.msra.mxu0 %v1922
    %2972 = vmatprep.subr.bf16.mxu0 0
    %2973 = vmatpush1.bf16.msra.mxu0 %v1929
    %2974 = vmatprep.subr.bf16.mxu0 0
    %2975 = vmatpush1.bf16.msra.mxu0 %v1936
    %2976 = vmatprep.subr.bf16.mxu0 0
    %2977 = vmatpush1.bf16.msra.mxu0 %v1943
    %2978 = vmatprep.subr.bf16.mxu0 0
    %2979 = vmatpush1.bf16.msra.mxu0 %v1950
    %2980 = vmatprep.mubr.bf16.mxu0 %v253
    %2981 = vmatmul.mubr.bf16.gmra.mrb[0].mxu0 %v252
    %v2982 = vpop.f32.mrb[0].mxu0
    %v2983 = vadd.f32 %v2943, %v2982
    %v2984 = vpop.f32.mrb[0].mxu0
    %v2985 = vpop.f32.mrb[0].mxu0
    %v2986 = vpop.f32.mrb[0].mxu0
    %2987 = vdwg.mxu0
    %2988 = vmatprep.subr.bf16.mxu0 0
    %2989 = vmatpush1.bf16.msra.mxu0 %v1957
    %2990 = vmatprep.subr.bf16.mxu0 0
    %2991 = vmatpush1.bf16.msra.mxu0 %v1964
    %2992 = vmatprep.subr.bf16.mxu0 0
    %2993 = vmatpush1.bf16.msra.mxu0 %v1971
    %2994 = vmatprep.subr.bf16.mxu0 0
    %2995 = vmatpush1.bf16.msra.mxu0 %v1978
    %2996 = vmatprep.subr.bf16.mxu0 0
    %2997 = vmatpush1.bf16.msra.mxu0 %v1985
    %2998 = vmatprep.subr.bf16.mxu0 0
    %2999 = vmatpush1.bf16.msra.mxu0 %v1992
    %3000 = vmatprep.subr.bf16.mxu0 0
    %3001 = vmatpush1.bf16.msra.mxu0 %v1999
    %3002 = vmatprep.subr.bf16.mxu0 0
    %3003 = vmatpush1.bf16.msra.mxu0 %v2006
    %3004 = vmatprep.subr.bf16.mxu0 0
    %3005 = vmatpush1.bf16.msra.mxu0 %v2013
    %3006 = vmatprep.subr.bf16.mxu0 0
    %3007 = vmatpush1.bf16.msra.mxu0 %v2020
    %3008 = vmatprep.subr.bf16.mxu0 0
    %3009 = vmatpush1.bf16.msra.mxu0 %v2027
    %3010 = vmatprep.subr.bf16.mxu0 0
    %3011 = vmatpush1.bf16.msra.mxu0 %v2034
    %3012 = vmatprep.subr.bf16.mxu0 0
    %3013 = vmatpush1.bf16.msra.mxu0 %v2041
    %3014 = vmatprep.subr.bf16.mxu0 0
    %3015 = vmatpush1.bf16.msra.mxu0 %v2048
    %3016 = vmatprep.subr.bf16.mxu0 0
    %3017 = vmatpush1.bf16.msra.mxu0 %v2055
    %3018 = vmatprep.subr.bf16.mxu0 0
    %3019 = vmatpush1.bf16.msra.mxu0 %v2062
    %3020 = vmatprep.mubr.bf16.mxu0 %v255
    %3021 = vmatmul.mubr.bf16.gmra.mrb[0].mxu0 %v254
    %v3022 = vpop.f32.mrb[0].mxu0
    %v3023 = vadd.f32 %v2983, %v3022
    %v3024 = vpop.f32.mrb[0].mxu0
    %v3025 = vpop.f32.mrb[0].mxu0
    %v3026 = vpop.f32.mrb[0].mxu0
    %3027 = vdwg.mxu0
    %3028 = vmatprep.subr.bf16.mxu0 0
    %3029 = vmatpush1.bf16.msra.mxu0 %v2069
    %3030 = vmatprep.subr.bf16.mxu0 0
    %3031 = vmatpush1.bf16.msra.mxu0 0
    %3032 = vmatprep.subr.bf16.mxu0 0
    %3033 = vmatpush1.bf16.msra.mxu0 0
    %3034 = vmatprep.subr.bf16.mxu0 0
    %3035 = vmatpush1.bf16.msra.mxu0 0
    %3036 = vmatprep.subr.bf16.mxu0 0
    %3037 = vmatpush1.bf16.msra.mxu0 0
    %3038 = vmatprep.subr.bf16.mxu0 0
    %3039 = vmatpush1.bf16.msra.mxu0 0
    %3040 = vmatprep.subr.bf16.mxu0 0
    %3041 = vmatpush1.bf16.msra.mxu0 0
    %3042 = vmatprep.subr.bf16.mxu0 0
    %3043 = vmatpush1.bf16.msra.mxu0 0
    %3044 = vmatprep.subr.bf16.mxu0 0
    %3045 = vmatpush1.bf16.msra.mxu0 0
    %3046 = vmatprep.subr.bf16.mxu0 0
    %3047 = vmatpush1.bf16.msra.mxu0 0
    %3048 = vmatprep.subr.bf16.mxu0 0
    %3049 = vmatpush1.bf16.msra.mxu0 0
    %3050 = vmatprep.subr.bf16.mxu0 0
    %3051 = vmatpush1.bf16.msra.mxu0 0
    %3052 = vmatprep.subr.bf16.mxu0 0
    %3053 = vmatpush1.bf16.msra.mxu0 0
    %3054 = vmatprep.subr.bf16.mxu0 0
    %3055 = vmatpush1.bf16.msra.mxu0 0
    %3056 = vmatprep.subr.bf16.mxu0 0
    %3057 = vmatpush1.bf16.msra.mxu0 0
    %3058 = vmatprep.subr.bf16.mxu0 0
    %3059 = vmatpush1.bf16.msra.mxu0 0
    %3060 = vmatprep.mubr.bf16.mxu0 0
    %3061 = vmatmul.mubr.bf16.gmra.mrb[0].mxu0 %v2414
    %v3062 = vpop.f32.mrb[0].mxu0
    %v3063 = vadd.f32 %v3023, %v3062
    %v3064 = vpop.f32.mrb[0].mxu0
    %v3065 = vpop.f32.mrb[0].mxu0
    %v3066 = vpop.f32.mrb[0].mxu0
    %3067 = vdwg.mxu0
    %v3068 = vxor.u32 %v2574, 2147483648
    %v3069 = vxor.u32 %v2576, 2147483648
    %v3070 = vxor.u32 %v2738, 2147483648
    %v3071 = vxor.u32 %v2740, 2147483648
    %v3072 = vxor.u32 %v2902, 2147483648
    %v3073 = vxor.u32 %v2904, 2147483648
    %v3074 = vxor.u32 %v3063, 2147483648
    %v3075 = vmul.f32 %v3068, 1.442695
    %v3076 = vpow.pop %v3075
    %v3077 = vmul.f32 %v3069, 1.442695
    %v3078 = vpow.pop %v3077
    %v3079 = vmul.f32 %v3070, 1.442695
    %v3080 = vpow.pop %v3079
    %v3081 = vmul.f32 %v3071, 1.442695
    %v3082 = vpow.pop %v3081
    %v3083 = vmul.f32 %v3072, 1.442695
    %v3084 = vpow.pop %v3083
    %v3085 = vmul.f32 %v3073, 1.442695
    %v3086 = vpow.pop %v3085
    %v3087 = vmul.f32 %v3074, 1.442695
    %v3088 = vpow.pop %v3087
    %v3089 = vadd.f32 %v3076, 1.0
    %v3090 = vadd.f32 %v3078, 1.0
    %v3091 = vadd.f32 %v3080, 1.0
    %v3092 = vadd.f32 %v3082, 1.0
    %v3093 = vadd.f32 %v3084, 1.0
    %v3094 = vadd.f32 %v3086, 1.0
    %v3095 = vadd.f32 %v3088, 1.0
    %v3096 = vrcp.pop %v3089
    %v3097 = vmul.f32 1.0, %v3096
    %v3098 = vrcp.pop %v3090
    %v3099 = vmul.f32 1.0, %v3098
    %v3100 = vrcp.pop %v3091
    %v3101 = vmul.f32 1.0, %v3100
    %v3102 = vrcp.pop %v3092
    %v3103 = vmul.f32 1.0, %v3102
    %v3104 = vrcp.pop %v3093
    %v3105 = vmul.f32 1.0, %v3104
    %v3106 = vrcp.pop %v3094
    %v3107 = vmul.f32 1.0, %v3106
    %v3108 = vrcp.pop %v3095
    %v3109 = vmul.f32 1.0, %v3108
    %v3110 = vld [vmem:[#allocation9] sm:$0x7f]
    %v3111 = vld [vmem:[#allocation10] sm:$0x7f]
    %v3112 = vadd.f32 %v3097, %v3099
    %v3113 = vadd.f32 %v3112, %v3101
    %v3114 = vadd.f32 %v3113, %v3103
    %v3115 = vadd.f32 %v3114, %v3105
    %v3116 = vadd.f32 %v3115, %v3107
    %v3117 = vsel %vm124, %v3109, 0.0
    %v3118 = vadd.f32 %v3116, %v3117
    %3119 = vadd.xlane.f32.xlu0 %v3118
    %v3120 = vpop.xlane.xlu0 %3119
    %v3121 = vmul.f32 %v3120, %v129
    %v3122 = vsub.f32 %v3097, %v3121
    %v3123 = vsub.f32 %v3099, %v3121
    %v3124 = vsub.f32 %v3101, %v3121
    %v3125 = vsub.f32 %v3103, %v3121
    %v3126 = vsub.f32 %v3105, %v3121
    %v3127 = vsub.f32 %v3107, %v3121
    %v3128 = vsub.f32 %v3109, %v3121
    %v3129 = vmul.f32 %v3122, %v3122
    %v3130 = vmul.f32 %v3123, %v3123
    %v3131 = vmul.f32 %v3124, %v3124
    %v3132 = vmul.f32 %v3125, %v3125
    %v3133 = vmul.f32 %v3126, %v3126
    %v3134 = vmul.f32 %v3127, %v3127
    %v3135 = vmul.f32 %v3128, %v3128
    %v3136 = vadd.f32 %v3129, %v3130
    %v3137 = vadd.f32 %v3136, %v3131
    %v3138 = vadd.f32 %v3137, %v3132
    %v3139 = vadd.f32 %v3138, %v3133
    %v3140 = vadd.f32 %v3139, %v3134
    %v3141 = vsel %vm124, %v3135, 0.0
    %v3142 = vadd.f32 %v3140, %v3141
    %3143 = vadd.xlane.f32.xlu0 %v3142
    %v3144 = vpop.xlane.xlu0 %3143
    %v3145 = vmul.f32 %v3144, %v129
    %v3146 = vadd.f32 %v3145, 1e-05
    %v3147 = vrsqrt.pop %v3146
    %v3148 = vmul.f32 %v3122, %v3147
    %v3149 = vmul.f32 %v3123, %v3147
    %v3150 = vmul.f32 %v3124, %v3147
    %v3151 = vmul.f32 %v3125, %v3147
    %v3152 = vmul.f32 %v3126, %v3147
    %v3153 = vmul.f32 %v3127, %v3147
    %v3154 = vmul.f32 %v3128, %v3147
    %v3156 = vlaneseq
    %v3157 = vshrl.u32 %v3156, 7
    %v3158 = vsub.s32 0, %v3157
    %v3159 = vrot.slane %v3110, %v3158
    %v3160 = vlaneseq
    %v3161 = vshrl.u32 %v3160, 7
    %v3162 = vsub.s32 1, %v3161
    %v3163 = vrot.slane %v3110, %v3162
    %v3164 = vlaneseq
    %v3165 = vshrl.u32 %v3164, 7
    %v3166 = vsub.s32 2, %v3165
    %v3167 = vrot.slane %v3110, %v3166
    %v3168 = vlaneseq
    %v3169 = vshrl.u32 %v3168, 7
    %v3170 = vsub.s32 3, %v3169
    %v3171 = vrot.slane %v3110, %v3170
    %v3172 = vlaneseq
    %v3173 = vshrl.u32 %v3172, 7
    %v3174 = vsub.s32 4, %v3173
    %v3175 = vrot.slane %v3110, %v3174
    %v3176 = vlaneseq
    %v3177 = vshrl.u32 %v3176, 7
    %v3178 = vsub.s32 5, %v3177
    %v3179 = vrot.slane %v3110, %v3178
    %v3180 = vlaneseq
    %v3181 = vshrl.u32 %v3180, 7
    %v3182 = vsub.s32 6, %v3181
    %v3183 = vrot.slane %v3110, %v3182
    %v3191 = vmul.f32 %v3148, %v3159
    %v3192 = vmul.f32 %v3149, %v3163
    %v3193 = vmul.f32 %v3150, %v3167
    %v3194 = vmul.f32 %v3151, %v3171
    %v3195 = vmul.f32 %v3152, %v3175
    %v3196 = vmul.f32 %v3153, %v3179
    %v3197 = vmul.f32 %v3154, %v3183
    %v3199 = vlaneseq
    %v3200 = vshrl.u32 %v3199, 7
    %v3201 = vsub.s32 0, %v3200
    %v3202 = vrot.slane %v3111, %v3201
    %v3203 = vlaneseq
    %v3204 = vshrl.u32 %v3203, 7
    %v3205 = vsub.s32 1, %v3204
    %v3206 = vrot.slane %v3111, %v3205
    %v3207 = vlaneseq
    %v3208 = vshrl.u32 %v3207, 7
    %v3209 = vsub.s32 2, %v3208
    %v3210 = vrot.slane %v3111, %v3209
    %v3211 = vlaneseq
    %v3212 = vshrl.u32 %v3211, 7
    %v3213 = vsub.s32 3, %v3212
    %v3214 = vrot.slane %v3111, %v3213
    %v3215 = vlaneseq
    %v3216 = vshrl.u32 %v3215, 7
    %v3217 = vsub.s32 4, %v3216
    %v3218 = vrot.slane %v3111, %v3217
    %v3219 = vlaneseq
    %v3220 = vshrl.u32 %v3219, 7
    %v3221 = vsub.s32 5, %v3220
    %v3222 = vrot.slane %v3111, %v3221
    %v3223 = vlaneseq
    %v3224 = vshrl.u32 %v3223, 7
    %v3225 = vsub.s32 6, %v3224
    %v3226 = vrot.slane %v3111, %v3225
    %v3234 = vadd.f32 %v3191, %v3202
    %v3235 = vadd.f32 %v3192, %v3206
    %v3236 = vadd.f32 %v3193, %v3210
    %v3237 = vadd.f32 %v3194, %v3214
    %v3238 = vadd.f32 %v3195, %v3218
    %v3239 = vadd.f32 %v3196, %v3222
    %v3240 = vadd.f32 %v3197, %v3226
    %v3241 = vld [vmem:[#allocation12] sm:$0x7f]
    %v3243 = vlaneseq
    %v3244 = vshrl.u32 %v3243, 7
    %v3245 = vsub.s32 0, %v3244
    %v3246 = vrot.slane %v3241, %v3245
    %v3247 = vlaneseq
    %v3248 = vshrl.u32 %v3247, 7
    %v3249 = vsub.s32 1, %v3248
    %v3250 = vrot.slane %v3241, %v3249
    %v3251 = vlaneseq
    %v3252 = vshrl.u32 %v3251, 7
    %v3253 = vsub.s32 2, %v3252
    %v3254 = vrot.slane %v3241, %v3253
    %v3255 = vlaneseq
    %v3256 = vshrl.u32 %v3255, 7
    %v3257 = vsub.s32 3, %v3256
    %v3258 = vrot.slane %v3241, %v3257
    %v3259 = vlaneseq
    %v3260 = vshrl.u32 %v3259, 7
    %v3261 = vsub.s32 4, %v3260
    %v3262 = vrot.slane %v3241, %v3261
    %v3263 = vlaneseq
    %v3264 = vshrl.u32 %v3263, 7
    %v3265 = vsub.s32 5, %v3264
    %v3266 = vrot.slane %v3241, %v3265
    %v3267 = vlaneseq
    %v3268 = vshrl.u32 %v3267, 7
    %v3269 = vsub.s32 6, %v3268
    %v3270 = vrot.slane %v3241, %v3269
    %v3278 = vmul.f32 %v3234, %v3246
    %v3279 = vmul.f32 %v3235, %v3250
    %v3280 = vmul.f32 %v3236, %v3254
    %v3281 = vmul.f32 %v3237, %v3258
    %v3282 = vmul.f32 %v3238, %v3262
    %v3283 = vmul.f32 %v3239, %v3266
    %v3284 = vmul.f32 %v3240, %v3270
    %v3285 = vadd.f32 %v3278, %v3279
    %v3286 = vadd.f32 %v3285, %v3280
    %v3287 = vadd.f32 %v3286, %v3281
    %v3288 = vadd.f32 %v3287, %v3282
    %v3289 = vadd.f32 %v3288, %v3283
    %v3290 = vsel %vm124, %v3284, 0.0
    %v3291 = vadd.f32 %v3289, %v3290
    %3292 = vadd.xlane.f32.xlu0 %v3291
    %v3293 = vpop.xlane.xlu0 %3292
    %v3294 = vxor.u32 %v3293, 2147483648
    %v3295 = vmul.f32 %v3294, 1.442695
    %v3296 = vpow.pop %v3295
    %v3297 = vadd.f32 %v3296, 1.0
    %v3298 = vrcp.pop %v3297
    %v3299 = vmul.f32 1.0, %v3298
    %vm3300 = vcmask 7168
    %3301 = vst.msk [vmem:[%s7] sm:$0xff] %vm3300, %v3299
    // Predicated region
    $region58: #{classifier_forward.1} parent=1 // pred_check
      _
    $region59: #{classifier_forward.1} parent=1 // pred_check_branch
      %3303 = sbr.rel (0) target = $region61
    $region60: #{classifier_forward.1} parent=1 // pred_region
      _
    $region61: #{classifier_forward.1} parent=1 // pred_fallthru
      _
    // Predicated region
    $region62: #{classifier_forward.1} parent=1 // pred_check
      _
    $region63: #{classifier_forward.1} parent=1 // pred_check_branch
      %3305 = sbr.rel (0) target = $region65
    $region64: #{classifier_forward.1} parent=1 // pred_region
      _
    $region65: #{classifier_forward.1} parent=1 // pred_fallthru
      _
    %3306 = vsyncpa [#allocation3], 1
    %3307 = vsyncpa [#allocation5], 1
    %3308 = vsyncpa [#allocation8], 1
    %3309 = vsyncpa [#allocation11], 1

</llo_original>
